<compile_context>
chip_gen: v6e
topology: v6e:2x2x1
jax: 0.10.0
libtpu: 0.0.40
codegen_flags: <defaults>
</compile_context>

<pallas_src>
import math
import jax
import jax.numpy as jnp
from jax.experimental import pallas as pl
from jax.experimental.pallas import tpu as pltpu

# ---- small synthetic config (mirrors the cfg fields the module uses) ----
VOCAB_SIZE = 100   # cfg.vocab_size
DIM        = 32    # cfg.dim
N_LAYERS   = 2     # cfg.n_layers
N_HEADS    = 4     # cfg.n_heads
DIM_FF     = 64    # cfg.dim_ff
MAX_LEN    = 8     # cfg.max_len
N_SEGMENTS = 2     # cfg.n_segments
N_LABELS   = 2     # n_labels
HEAD_DIM   = DIM // N_HEADS
LN_EPS     = 1e-12  # matches PyTorch BERT LayerNorm default


# ----------------------------- in-kernel math -----------------------------
def _layer_norm(x, g, b):
    mu = jnp.mean(x, axis=-1, keepdims=True)
    var = jnp.mean((x - mu) ** 2, axis=-1, keepdims=True)
    return g * ((x - mu) * jax.lax.rsqrt(var + LN_EPS)) + b


def _erf(x):
    # Abramowitz & Stegun 7.1.26 rational approximation (|err| <= 1.5e-7, i.e.
    # f32-exact) built only from VPU/EUP ops that Mosaic lowers cleanly.
    p = 0.3275911
    a1, a2, a3, a4, a5 = (0.254829592, -0.284496736, 1.421413741,
                          -1.453152027, 1.061405429)
    sgn = jnp.where(x >= 0.0, 1.0, -1.0)
    ax = jnp.abs(x)
    t = 1.0 / (1.0 + p * ax)
    poly = ((((a5 * t + a4) * t + a3) * t + a2) * t + a1) * t
    return sgn * (1.0 - poly * jnp.exp(-ax * ax))


def _gelu(x):
    # exact (erf-based) GELU, as in the reference PyTorch model
    return x * 0.5 * (1.0 + _erf(x * (1.0 / math.sqrt(2.0))))


# ------------------------------ fused kernel -------------------------------
def fused_classifier_kernel(e_ref, bias_ref, embln_ref,
                            wattn_ref, battn_ref, wff1_ref, c1_ref, wff2_ref,
                            lncv_ref, fcw_ref, fcb_ref, clsw_ref, clsb_ref,
                            out_ref, h_ref):
    """grid=(N_LAYERS,): one transformer block per step.  The (B*S, D) activation
    stays resident in the VMEM scratch h_ref across layers.  Step 0 additionally
    runs the embedding LayerNorm, the last step runs pooler(tanh) + classifier."""
    layer = pl.program_id(0)
    bsz = out_ref.shape[0]
    seq = h_ref.shape[0] // bsz

    @pl.when(layer == 0)
    def _embed_ln():
        # embedding dropout: identity
        h_ref[...] = _layer_norm(e_ref[...], embln_ref[0], embln_ref[1])

    x = h_ref[...]                      # (B*S, D) f32 resident activation
    bias = bias_ref[...]                # (B*S, B*S) additive attention bias

    def mm(a, w):                       # bf16 MXU operands, f32 accumulation
        return jnp.dot(a.astype(jnp.bfloat16), w.astype(jnp.bfloat16),
                       preferred_element_type=jnp.float32)

    # --- multi-head self-attention (packed weights: [wq|wk|wv|wo]) ---
    q = mm(x, wattn_ref[0, 0]) + battn_ref[0, 0]
    k = mm(x, wattn_ref[0, 1]) + battn_ref[0, 1]
    v = mm(x, wattn_ref[0, 2]) + battn_ref[0, 2]

    scale = 1.0 / math.sqrt(HEAD_DIM)
    col = jax.lax.broadcasted_iota(jnp.int32, (1, DIM), 1)
    k_bf = k.astype(jnp.bfloat16)
    attn = jnp.zeros(x.shape, jnp.float32)
    # Per-head attention with full-width operands + column masks: exact, since
    # masked q columns contribute zero to the contraction and masked v keeps each
    # head's output in disjoint columns.  (Acceptable at D=32 per review.)
    for hd in range(N_HEADS):
        lo = hd * HEAD_DIM
        hm = jnp.where((col >= lo) & (col < lo + HEAD_DIM), 1.0, 0.0)   # (1, D)
        s = jax.lax.dot_general((q * hm).astype(jnp.bfloat16), k_bf,
                                (((1,), (1,)), ((), ())),
                                preferred_element_type=jnp.float32) * scale
        s = s + bias                    # key padding + cross-batch block mask
        s = s - jnp.max(s, axis=-1, keepdims=True)
        es = jnp.exp(s)
        p = es / jnp.sum(es, axis=-1, keepdims=True)   # attn dropout: identity
        attn = attn + jnp.dot(p.astype(jnp.bfloat16),
                              (v * hm).astype(jnp.bfloat16),
                              preferred_element_type=jnp.float32)

    proj = mm(attn, wattn_ref[0, 3]) + battn_ref[0, 3]
    h1 = _layer_norm(x + proj, lncv_ref[0, 0], lncv_ref[0, 1])  # resid drop: identity

    # --- position-wise FFN ---
    ff = _gelu(mm(h1, wff1_ref[0]) + c1_ref[0])
    ff = mm(ff, wff2_ref[0]) + lncv_ref[0, 4]
    h2 = _layer_norm(h1 + ff, lncv_ref[0, 2], lncv_ref[0, 3])
    h_ref[...] = h2                      # keep resident for the next layer

    @pl.when(layer == pl.num_programs(0) - 1)
    def _pooler_classifier():
        # pooled = tanh(fc(h[:, 0])); logits = classifier(pooled); dropout: identity
        h_cls = jnp.concatenate(
            [h2[b * seq:b * seq + 1, :] for b in range(bsz)], axis=0)   # (B, D)
        pooled = jnp.tanh(mm(h_cls, fcw_ref[...]) + fcb_ref[...])
        out_ref[...] = (mm(pooled, clsw_ref[...])
                        + clsb_ref[...]).astype(out_ref.dtype)


# ------------------------------ params & packing ---------------------------
def init_params(key):
    ks = iter(jax.random.split(key, 8 + N_LAYERS * 16))

    def w(shape):
        return jax.random.normal(next(ks), shape, jnp.float32) * 0.02

    p = {
        "tok_embed": w((VOCAB_SIZE, DIM)),
        "pos_embed": w((MAX_LEN, DIM)),
        "seg_embed": w((N_SEGMENTS, DIM)),
        "emb_gamma": jnp.ones((1, DIM), jnp.float32),
        "emb_beta": jnp.zeros((1, DIM), jnp.float32),
        "layers": [],
        "fc_w": w((DIM, DIM)),
        "fc_b": w((1, DIM)),
        "cls_w": w((DIM, N_LABELS)),
        "cls_b": w((1, N_LABELS)),
    }
    for _ in range(N_LAYERS):
        p["layers"].append(dict(
            wq=w((DIM, DIM)), bq=w((1, DIM)),
            wk=w((DIM, DIM)), bk=w((1, DIM)),
            wv=w((DIM, DIM)), bv=w((1, DIM)),
            wo=w((DIM, DIM)), bo=w((1, DIM)),
            g1=jnp.ones((1, DIM), jnp.float32), b1=jnp.zeros((1, DIM), jnp.float32),
            w1=w((DIM, DIM_FF)), c1=w((1, DIM_FF)),
            w2=w((DIM_FF, DIM)), c2=w((1, DIM)),
            g2=jnp.ones((1, DIM), jnp.float32), b2=jnp.zeros((1, DIM), jnp.float32),
        ))
    return p


def _pack_params(params):
    """Stack per-layer tensors with a leading N_LAYERS axis and pack them into a
    few wide arrays; matmul weights are stored in bf16 for the MXU fast path."""
    L = params["layers"]
    w_attn = jnp.stack([jnp.stack([lp["wq"], lp["wk"], lp["wv"], lp["wo"]])
                        for lp in L]).astype(jnp.bfloat16)            # (NL, 4, D, D)
    b_attn = jnp.stack([jnp.stack([lp["bq"], lp["bk"], lp["bv"], lp["bo"]])
                        for lp in L])                                 # (NL, 4, 1, D)
    w_ff1 = jnp.stack([lp["w1"] for lp in L]).astype(jnp.bfloat16)    # (NL, D, FF)
    c1 = jnp.stack([lp["c1"] for lp in L])                            # (NL, 1, FF)
    w_ff2 = jnp.stack([lp["w2"] for lp in L]).astype(jnp.bfloat16)    # (NL, FF, D)
    lncv = jnp.stack([jnp.stack([lp["g1"], lp["b1"], lp["g2"], lp["b2"], lp["c2"]])
                      for lp in L])                                   # (NL, 5, 1, D)
    emb_ln = jnp.stack([params["emb_gamma"], params["emb_beta"]])     # (2, 1, D)
    return (emb_ln, w_attn, b_attn, w_ff1, c1, w_ff2, lncv,
            params["fc_w"].astype(jnp.bfloat16), params["fc_b"],
            params["cls_w"].astype(jnp.bfloat16), params["cls_b"])


# ------------------------------ forward ------------------------------------
def classifier_forward(params, input_ids, segment_ids, input_mask):
    B, S = input_ids.shape
    pos = jnp.arange(S, dtype=jnp.int32)[None, :]
    # embedding gathers are data-dependent: kept in plain JAX (glue)
    e = (params["tok_embed"][input_ids]
         + params["pos_embed"][pos]
         + params["seg_embed"][segment_ids]).astype(jnp.float32)      # (B, S, D)
    e = e.reshape(B * S, DIM)

    # Additive attention bias over the batch-flattened key axis:
    #   same batch : -10000 * (1 - mask[b, key])   (matches the PyTorch model)
    #   cross batch: -1e9  -> exp underflows to exactly 0, so per-batch softmax
    m = input_mask.astype(jnp.float32)                                # (B, S)
    key_bias = -10000.0 * (1.0 - m)                                   # (B, S)
    same = jnp.eye(B, dtype=bool)[:, None, :, None]                   # (B, 1, B, 1)
    bias4 = jnp.where(same, key_bias[None, None, :, :], jnp.float32(-1e9))
    attn_bias = jnp.broadcast_to(bias4, (B, S, B, S)).reshape(B * S, B * S)

    (emb_ln, w_attn, b_attn, w_ff1, c1, w_ff2, lncv,
     fc_w, fc_b, cls_w, cls_b) = _pack_params(params)

    BS = B * S
    in_specs = [
        pl.BlockSpec((BS, DIM), lambda l: (0, 0)),                    # embeddings
        pl.BlockSpec((BS, BS), lambda l: (0, 0)),                     # attn bias
        pl.BlockSpec((2, 1, DIM), lambda l: (0, 0, 0)),               # emb LN g/b
        pl.BlockSpec((1, 4, DIM, DIM), lambda l: (l, 0, 0, 0)),       # [wq|wk|wv|wo]
        pl.BlockSpec((1, 4, 1, DIM), lambda l: (l, 0, 0, 0)),         # [bq|bk|bv|bo]
        pl.BlockSpec((1, DIM, DIM_FF), lambda l: (l, 0, 0)),          # w1
        pl.BlockSpec((1, 1, DIM_FF), lambda l: (l, 0, 0)),            # c1
        pl.BlockSpec((1, DIM_FF, DIM), lambda l: (l, 0, 0)),          # w2
        pl.BlockSpec((1, 5, 1, DIM), lambda l: (l, 0, 0, 0)),         # [g1|b1|g2|b2|c2]
        pl.BlockSpec((DIM, DIM), lambda l: (0, 0)),                   # fc_w
        pl.BlockSpec((1, DIM), lambda l: (0, 0)),                     # fc_b
        pl.BlockSpec((DIM, N_LABELS), lambda l: (0, 0)),              # cls_w
        pl.BlockSpec((1, N_LABELS), lambda l: (0, 0)),                # cls_b
    ]
    return pl.pallas_call(
        fused_classifier_kernel,
        out_shape=jax.ShapeDtypeStruct((B, N_LABELS), jnp.float32),
        grid=(N_LAYERS,),
        in_specs=in_specs,
        out_specs=pl.BlockSpec((B, N_LABELS), lambda l: (0, 0)),
        scratch_shapes=[pltpu.VMEM((BS, DIM), jnp.float32)],          # resident act.
        compiler_params=pltpu.CompilerParams(
            dimension_semantics=("arbitrary",)),   # layer axis is sequential
    )(e, attn_bias, emb_ln, w_attn, b_attn, w_ff1, c1, w_ff2, lncv,
      fc_w, fc_b, cls_w, cls_b)


# ------------------------------ main ----------------------------------------
if __name__ == "__main__":
    root = jax.random.PRNGKey(0)
    k_params, k_ids = jax.random.split(root)
    params = init_params(k_params)

    B, S = 2, MAX_LEN
    input_ids = jax.random.randint(k_ids, (B, S), 0, VOCAB_SIZE, dtype=jnp.int32)
    segment_ids = jnp.concatenate(
        [jnp.zeros((B, S // 2), jnp.int32), jnp.ones((B, S // 2), jnp.int32)], axis=1)
    input_mask = jnp.array([[1] * S, [1] * (S - 2) + [0, 0]], dtype=jnp.int32)

    logits = classifier_forward(params, input_ids, segment_ids, input_mask)
    jax.block_until_ready(logits)
    assert logits.shape == (B, N_LABELS)
    print("KERNEL_OK")
</pallas_src>

<mosaic_0001>
module attributes {stable_mosaic.version = 11 : i64} {
  func.func @fused_classifier_kernel(%arg0: i32, %arg1: memref<16x32xf32, #tpu.memory_space<vmem>>, %arg2: memref<16x16xf32, #tpu.memory_space<vmem>>, %arg3: memref<2x1x32xf32, #tpu.memory_space<vmem>>, %arg4: memref<1x4x32x32xbf16, #tpu.memory_space<vmem>>, %arg5: memref<1x4x1x32xf32, #tpu.memory_space<vmem>>, %arg6: memref<1x32x64xbf16, #tpu.memory_space<vmem>>, %arg7: memref<1x1x64xf32, #tpu.memory_space<vmem>>, %arg8: memref<1x64x32xbf16, #tpu.memory_space<vmem>>, %arg9: memref<1x5x1x32xf32, #tpu.memory_space<vmem>>, %arg10: memref<32x32xbf16, #tpu.memory_space<vmem>>, %arg11: memref<1x32xf32, #tpu.memory_space<vmem>>, %arg12: memref<32x2xbf16, #tpu.memory_space<vmem>>, %arg13: memref<1x2xf32, #tpu.memory_space<vmem>>, %arg14: memref<2x2xf32, #tpu.memory_space<vmem>>, %arg15: memref<16x32xf32, #tpu.memory_space<vmem>>) attributes {dimension_semantics = [#tpu.dimension_semantics<arbitrary>], iteration_bounds = array<i64: 2>, scalar_prefetch = 0 : i64, scratch_operands = 1 : i64, tpu.core_type = #tpu.core_type<tc>, window_params = [{pipeline_mode = #tpu.pipeline_mode<synchronous>, transform_indices = @transform_0, window_bounds = array<i64: 16, 32>}, {pipeline_mode = #tpu.pipeline_mode<synchronous>, transform_indices = @transform_1, window_bounds = array<i64: 16, 16>}, {pipeline_mode = #tpu.pipeline_mode<synchronous>, transform_indices = @transform_2, window_bounds = array<i64: 2, 1, 32>}, {transform_indices = @transform_3, window_bounds = array<i64: 1, 4, 32, 32>}, {transform_indices = @transform_4, window_bounds = array<i64: 1, 4, 1, 32>}, {transform_indices = @transform_5, window_bounds = array<i64: 1, 32, 64>}, {transform_indices = @transform_6, window_bounds = array<i64: 1, 1, 64>}, {transform_indices = @transform_7, window_bounds = array<i64: 1, 64, 32>}, {transform_indices = @transform_8, window_bounds = array<i64: 1, 5, 1, 32>}, {pipeline_mode = #tpu.pipeline_mode<synchronous>, transform_indices = @transform_9, window_bounds = array<i64: 32, 32>}, {pipeline_mode = #tpu.pipeline_mode<synchronous>, transform_indices = @transform_10, window_bounds = array<i64: 1, 32>}, {pipeline_mode = #tpu.pipeline_mode<synchronous>, transform_indices = @transform_11, window_bounds = array<i64: 32, 2>}, {pipeline_mode = #tpu.pipeline_mode<synchronous>, transform_indices = @transform_12, window_bounds = array<i64: 1, 2>}, {pipeline_mode = #tpu.pipeline_mode<synchronous>, transform_indices = @transform_13, window_bounds = array<i64: 2, 2>}]} {
    %c0_i32 = arith.constant 0 : i32
    %0 = arith.cmpi eq, %arg0, %c0_i32 : i32
    %1 = arith.extui %0 : i1 to i32
    %c0_i32_0 = arith.constant 0 : i32
    %2 = arith.cmpi ne, %1, %c0_i32_0 : i32
    scf.if %2 {
      %c0_128 = arith.constant 0 : index
      %c0_129 = arith.constant 0 : index
      %275 = vector.load %arg1[%c0_128, %c0_129] : memref<16x32xf32, #tpu.memory_space<vmem>>, vector<16x32xf32>
      %c0_130 = arith.constant 0 : index
      %c0_131 = arith.constant 0 : index
      %c0_132 = arith.constant 0 : index
      %276 = vector.load %arg3[%c0_130, %c0_131, %c0_132] : memref<2x1x32xf32, #tpu.memory_space<vmem>>, vector<1x1x32xf32>
      %277 = vector.shape_cast %276 : vector<1x1x32xf32> to vector<1x32xf32>
      %c1_133 = arith.constant 1 : index
      %c0_134 = arith.constant 0 : index
      %c0_135 = arith.constant 0 : index
      %278 = vector.load %arg3[%c1_133, %c0_134, %c0_135] : memref<2x1x32xf32, #tpu.memory_space<vmem>>, vector<1x1x32xf32>
      %279 = vector.shape_cast %278 : vector<1x1x32xf32> to vector<1x32xf32>
      %cst_136 = arith.constant dense<0.000000e+00> : vector<16xf32>
      %280 = vector.multi_reduction <add>, %275, %cst_136 [1] : vector<16x32xf32> to vector<16xf32>
      %281 = vector.shape_cast %280 : vector<16xf32> to vector<16x1xf32>
      %cst_137 = arith.constant 3.200000e+01 : f32
      %282 = vector.broadcast %cst_137 : f32 to vector<16x1xf32>
      %283 = arith.divf %281, %282 : vector<16x1xf32>
      %284 = vector.broadcast %283 : vector<16x1xf32> to vector<16x32xf32>
      %285 = arith.subf %275, %284 : vector<16x32xf32>
      %286 = arith.mulf %285, %285 : vector<16x32xf32>
      %cst_138 = arith.constant dense<0.000000e+00> : vector<16xf32>
      %287 = vector.multi_reduction <add>, %286, %cst_138 [1] : vector<16x32xf32> to vector<16xf32>
      %288 = vector.shape_cast %287 : vector<16xf32> to vector<16x1xf32>
      %cst_139 = arith.constant 3.200000e+01 : f32
      %289 = vector.broadcast %cst_139 : f32 to vector<16x1xf32>
      %290 = arith.divf %288, %289 : vector<16x1xf32>
      %291 = vector.broadcast %283 : vector<16x1xf32> to vector<16x32xf32>
      %292 = arith.subf %275, %291 : vector<16x32xf32>
      %cst_140 = arith.constant 9.99999996E-13 : f32
      %293 = vector.broadcast %cst_140 : f32 to vector<16x1xf32>
      %294 = arith.addf %290, %293 : vector<16x1xf32>
      %295 = math.rsqrt %294 : vector<16x1xf32>
      %296 = vector.broadcast %295 : vector<16x1xf32> to vector<16x32xf32>
      %297 = arith.mulf %292, %296 : vector<16x32xf32>
      %298 = vector.broadcast %277 : vector<1x32xf32> to vector<16x32xf32>
      %299 = arith.mulf %298, %297 : vector<16x32xf32>
      %300 = vector.broadcast %279 : vector<1x32xf32> to vector<16x32xf32>
      %301 = arith.addf %299, %300 : vector<16x32xf32>
      %c0_141 = arith.constant 0 : index
      %c0_142 = arith.constant 0 : index
      %302 = vector.load %arg15[%c0_141, %c0_142] : memref<16x32xf32, #tpu.memory_space<vmem>>, vector<16x32xf32>
      tpu.vector_store %arg15[%c0_141, %c0_142], %301 {strides = array<i32>} : memref<16x32xf32, #tpu.memory_space<vmem>>, vector<16x32xf32>,
    } else {
    }
    %c0 = arith.constant 0 : index
    %c0_1 = arith.constant 0 : index
    %3 = vector.load %arg15[%c0, %c0_1] : memref<16x32xf32, #tpu.memory_space<vmem>>, vector<16x32xf32>
    %c0_2 = arith.constant 0 : index
    %c0_3 = arith.constant 0 : index
    %4 = vector.load %arg2[%c0_2, %c0_3] : memref<16x16xf32, #tpu.memory_space<vmem>>, vector<16x16xf32>
    %c0_4 = arith.constant 0 : index
    %c0_5 = arith.constant 0 : index
    %c0_6 = arith.constant 0 : index
    %c0_7 = arith.constant 0 : index
    %5 = vector.load %arg4[%c0_4, %c0_5, %c0_6, %c0_7] : memref<1x4x32x32xbf16, #tpu.memory_space<vmem>>, vector<1x1x32x32xbf16>
    %6 = vector.shape_cast %5 : vector<1x1x32x32xbf16> to vector<32x32xbf16>
    %7 = arith.truncf %3 : vector<16x32xf32> to vector<16x32xbf16>
    %cst = arith.constant dense<0.000000e+00> : vector<16x32xf32>
    %8 = tpu.matmul %7, %6, %cst {dimension_numbers = #tpu.dot_dimension_numbers<[1], [0], [0], [1], [0, 0, 1, 1], [], []>} : vector<16x32xbf16>, vector<32x32xbf16>, vector<16x32xf32> -> vector<16x32xf32>
    %c0_8 = arith.constant 0 : index
    %c0_9 = arith.constant 0 : index
    %c0_10 = arith.constant 0 : index
    %c0_11 = arith.constant 0 : index
    %9 = vector.load %arg5[%c0_8, %c0_9, %c0_10, %c0_11] : memref<1x4x1x32xf32, #tpu.memory_space<vmem>>, vector<1x1x1x32xf32>
    %10 = vector.shape_cast %9 : vector<1x1x1x32xf32> to vector<1x32xf32>
    %11 = vector.broadcast %10 : vector<1x32xf32> to vector<16x32xf32>
    %12 = arith.addf %8, %11 : vector<16x32xf32>
    %c0_12 = arith.constant 0 : index
    %c1 = arith.constant 1 : index
    %c0_13 = arith.constant 0 : index
    %c0_14 = arith.constant 0 : index
    %13 = vector.load %arg4[%c0_12, %c1, %c0_13, %c0_14] : memref<1x4x32x32xbf16, #tpu.memory_space<vmem>>, vector<1x1x32x32xbf16>
    %14 = vector.shape_cast %13 : vector<1x1x32x32xbf16> to vector<32x32xbf16>
    %15 = arith.truncf %3 : vector<16x32xf32> to vector<16x32xbf16>
    %cst_15 = arith.constant dense<0.000000e+00> : vector<16x32xf32>
    %16 = tpu.matmul %15, %14, %cst_15 {dimension_numbers = #tpu.dot_dimension_numbers<[1], [0], [0], [1], [0, 0, 1, 1], [], []>} : vector<16x32xbf16>, vector<32x32xbf16>, vector<16x32xf32> -> vector<16x32xf32>
    %c0_16 = arith.constant 0 : index
    %c1_17 = arith.constant 1 : index
    %c0_18 = arith.constant 0 : index
    %c0_19 = arith.constant 0 : index
    %17 = vector.load %arg5[%c0_16, %c1_17, %c0_18, %c0_19] : memref<1x4x1x32xf32, #tpu.memory_space<vmem>>, vector<1x1x1x32xf32>
    %18 = vector.shape_cast %17 : vector<1x1x1x32xf32> to vector<1x32xf32>
    %19 = vector.broadcast %18 : vector<1x32xf32> to vector<16x32xf32>
    %20 = arith.addf %16, %19 : vector<16x32xf32>
    %c0_20 = arith.constant 0 : index
    %c2 = arith.constant 2 : index
    %c0_21 = arith.constant 0 : index
    %c0_22 = arith.constant 0 : index
    %21 = vector.load %arg4[%c0_20, %c2, %c0_21, %c0_22] : memref<1x4x32x32xbf16, #tpu.memory_space<vmem>>, vector<1x1x32x32xbf16>
    %22 = vector.shape_cast %21 : vector<1x1x32x32xbf16> to vector<32x32xbf16>
    %23 = arith.truncf %3 : vector<16x32xf32> to vector<16x32xbf16>
    %cst_23 = arith.constant dense<0.000000e+00> : vector<16x32xf32>
    %24 = tpu.matmul %23, %22, %cst_23 {dimension_numbers = #tpu.dot_dimension_numbers<[1], [0], [0], [1], [0, 0, 1, 1], [], []>} : vector<16x32xbf16>, vector<32x32xbf16>, vector<16x32xf32> -> vector<16x32xf32>
    %c0_24 = arith.constant 0 : index
    %c2_25 = arith.constant 2 : index
    %c0_26 = arith.constant 0 : index
    %c0_27 = arith.constant 0 : index
    %25 = vector.load %arg5[%c0_24, %c2_25, %c0_26, %c0_27] : memref<1x4x1x32xf32, #tpu.memory_space<vmem>>, vector<1x1x1x32xf32>
    %26 = vector.shape_cast %25 : vector<1x1x1x32xf32> to vector<1x32xf32>
    %27 = vector.broadcast %26 : vector<1x32xf32> to vector<16x32xf32>
    %28 = arith.addf %24, %27 : vector<16x32xf32>
    %29 = tpu.iota {dimensions = array<i32: 1>} : vector<1x32xi32>
    %30 = arith.truncf %20 : vector<16x32xf32> to vector<16x32xbf16>
    %cst_28 = arith.constant 0.000000e+00 : f32
    %31 = vector.broadcast %cst_28 : f32 to vector<16x32xf32>
    %c0_i32_29 = arith.constant 0 : i32
    %32 = vector.broadcast %c0_i32_29 : i32 to vector<1x32xi32>
    %33 = arith.cmpi sge, %29, %32 : vector<1x32xi32>
    %c8_i32 = arith.constant 8 : i32
    %34 = vector.broadcast %c8_i32 : i32 to vector<1x32xi32>
    %35 = arith.cmpi slt, %29, %34 : vector<1x32xi32>
    %36 = arith.andi %33, %35 : vector<1x32xi1>
    %cst_30 = arith.constant 1.000000e+00 : f32
    %cst_31 = arith.constant 0.000000e+00 : f32
    %37 = vector.broadcast %cst_30 : f32 to vector<1x32xf32>
    %38 = vector.broadcast %cst_31 : f32 to vector<1x32xf32>
    %39 = arith.select %36, %37, %38 : vector<1x32xi1>, vector<1x32xf32>
    %40 = vector.broadcast %39 : vector<1x32xf32> to vector<16x32xf32>
    %41 = arith.mulf %12, %40 : vector<16x32xf32>
    %42 = arith.truncf %41 : vector<16x32xf32> to vector<16x32xbf16>
    %cst_32 = arith.constant dense<0.000000e+00> : vector<16x16xf32>
    %43 = tpu.matmul %42, %30, %cst_32 {dimension_numbers = #tpu.dot_dimension_numbers<[1], [1], [0], [0], [0, 0, 1, 0], [], []>} : vector<16x32xbf16>, vector<16x32xbf16>, vector<16x16xf32> -> vector<16x16xf32>
    %cst_33 = arith.constant 0.353553385 : f32
    %44 = vector.broadcast %cst_33 : f32 to vector<16x16xf32>
    %45 = arith.mulf %43, %44 : vector<16x16xf32>
    %46 = arith.addf %45, %4 : vector<16x16xf32>
    %cst_34 = arith.constant dense<0xFF800000> : vector<16xf32>
    %47 = vector.multi_reduction <maximumf>, %46, %cst_34 [1] : vector<16x16xf32> to vector<16xf32>
    %48 = vector.shape_cast %47 : vector<16xf32> to vector<16x1xf32>
    %49 = vector.broadcast %48 : vector<16x1xf32> to vector<16x16xf32>
    %50 = arith.subf %46, %49 : vector<16x16xf32>
    %51 = math.exp %50 : vector<16x16xf32>
    %cst_35 = arith.constant dense<0.000000e+00> : vector<16xf32>
    %52 = vector.multi_reduction <add>, %51, %cst_35 [1] : vector<16x16xf32> to vector<16xf32>
    %53 = vector.shape_cast %52 : vector<16xf32> to vector<16x1xf32>
    %54 = vector.broadcast %53 : vector<16x1xf32> to vector<16x16xf32>
    %55 = arith.divf %51, %54 : vector<16x16xf32>
    %56 = arith.truncf %55 : vector<16x16xf32> to vector<16x16xbf16>
    %57 = vector.broadcast %39 : vector<1x32xf32> to vector<16x32xf32>
    %58 = arith.mulf %28, %57 : vector<16x32xf32>
    %59 = arith.truncf %58 : vector<16x32xf32> to vector<16x32xbf16>
    %cst_36 = arith.constant dense<0.000000e+00> : vector<16x32xf32>
    %60 = tpu.matmul %56, %59, %cst_36 {dimension_numbers = #tpu.dot_dimension_numbers<[1], [0], [0], [1], [0, 0, 1, 1], [], []>} : vector<16x16xbf16>, vector<16x32xbf16>, vector<16x32xf32> -> vector<16x32xf32>
    %61 = arith.addf %31, %60 : vector<16x32xf32>
    %c8_i32_37 = arith.constant 8 : i32
    %62 = vector.broadcast %c8_i32_37 : i32 to vector<1x32xi32>
    %63 = arith.cmpi sge, %29, %62 : vector<1x32xi32>
    %c16_i32 = arith.constant 16 : i32
    %64 = vector.broadcast %c16_i32 : i32 to vector<1x32xi32>
    %65 = arith.cmpi slt, %29, %64 : vector<1x32xi32>
    %66 = arith.andi %63, %65 : vector<1x32xi1>
    %cst_38 = arith.constant 1.000000e+00 : f32
    %cst_39 = arith.constant 0.000000e+00 : f32
    %67 = vector.broadcast %cst_38 : f32 to vector<1x32xf32>
    %68 = vector.broadcast %cst_39 : f32 to vector<1x32xf32>
    %69 = arith.select %66, %67, %68 : vector<1x32xi1>, vector<1x32xf32>
    %70 = vector.broadcast %69 : vector<1x32xf32> to vector<16x32xf32>
    %71 = arith.mulf %12, %70 : vector<16x32xf32>
    %72 = arith.truncf %71 : vector<16x32xf32> to vector<16x32xbf16>
    %cst_40 = arith.constant dense<0.000000e+00> : vector<16x16xf32>
    %73 = tpu.matmul %72, %30, %cst_40 {dimension_numbers = #tpu.dot_dimension_numbers<[1], [1], [0], [0], [0, 0, 1, 0], [], []>} : vector<16x32xbf16>, vector<16x32xbf16>, vector<16x16xf32> -> vector<16x16xf32>
    %cst_41 = arith.constant 0.353553385 : f32
    %74 = vector.broadcast %cst_41 : f32 to vector<16x16xf32>
    %75 = arith.mulf %73, %74 : vector<16x16xf32>
    %76 = arith.addf %75, %4 : vector<16x16xf32>
    %cst_42 = arith.constant dense<0xFF800000> : vector<16xf32>
    %77 = vector.multi_reduction <maximumf>, %76, %cst_42 [1] : vector<16x16xf32> to vector<16xf32>
    %78 = vector.shape_cast %77 : vector<16xf32> to vector<16x1xf32>
    %79 = vector.broadcast %78 : vector<16x1xf32> to vector<16x16xf32>
    %80 = arith.subf %76, %79 : vector<16x16xf32>
    %81 = math.exp %80 : vector<16x16xf32>
    %cst_43 = arith.constant dense<0.000000e+00> : vector<16xf32>
    %82 = vector.multi_reduction <add>, %81, %cst_43 [1] : vector<16x16xf32> to vector<16xf32>
    %83 = vector.shape_cast %82 : vector<16xf32> to vector<16x1xf32>
    %84 = vector.broadcast %83 : vector<16x1xf32> to vector<16x16xf32>
    %85 = arith.divf %81, %84 : vector<16x16xf32>
    %86 = arith.truncf %85 : vector<16x16xf32> to vector<16x16xbf16>
    %87 = vector.broadcast %69 : vector<1x32xf32> to vector<16x32xf32>
    %88 = arith.mulf %28, %87 : vector<16x32xf32>
    %89 = arith.truncf %88 : vector<16x32xf32> to vector<16x32xbf16>
    %cst_44 = arith.constant dense<0.000000e+00> : vector<16x32xf32>
    %90 = tpu.matmul %86, %89, %cst_44 {dimension_numbers = #tpu.dot_dimension_numbers<[1], [0], [0], [1], [0, 0, 1, 1], [], []>} : vector<16x16xbf16>, vector<16x32xbf16>, vector<16x32xf32> -> vector<16x32xf32>
    %91 = arith.addf %61, %90 : vector<16x32xf32>
    %c16_i32_45 = arith.constant 16 : i32
    %92 = vector.broadcast %c16_i32_45 : i32 to vector<1x32xi32>
    %93 = arith.cmpi sge, %29, %92 : vector<1x32xi32>
    %c24_i32 = arith.constant 24 : i32
    %94 = vector.broadcast %c24_i32 : i32 to vector<1x32xi32>
    %95 = arith.cmpi slt, %29, %94 : vector<1x32xi32>
    %96 = arith.andi %93, %95 : vector<1x32xi1>
    %cst_46 = arith.constant 1.000000e+00 : f32
    %cst_47 = arith.constant 0.000000e+00 : f32
    %97 = vector.broadcast %cst_46 : f32 to vector<1x32xf32>
    %98 = vector.broadcast %cst_47 : f32 to vector<1x32xf32>
    %99 = arith.select %96, %97, %98 : vector<1x32xi1>, vector<1x32xf32>
    %100 = vector.broadcast %99 : vector<1x32xf32> to vector<16x32xf32>
    %101 = arith.mulf %12, %100 : vector<16x32xf32>
    %102 = arith.truncf %101 : vector<16x32xf32> to vector<16x32xbf16>
    %cst_48 = arith.constant dense<0.000000e+00> : vector<16x16xf32>
    %103 = tpu.matmul %102, %30, %cst_48 {dimension_numbers = #tpu.dot_dimension_numbers<[1], [1], [0], [0], [0, 0, 1, 0], [], []>} : vector<16x32xbf16>, vector<16x32xbf16>, vector<16x16xf32> -> vector<16x16xf32>
    %cst_49 = arith.constant 0.353553385 : f32
    %104 = vector.broadcast %cst_49 : f32 to vector<16x16xf32>
    %105 = arith.mulf %103, %104 : vector<16x16xf32>
    %106 = arith.addf %105, %4 : vector<16x16xf32>
    %cst_50 = arith.constant dense<0xFF800000> : vector<16xf32>
    %107 = vector.multi_reduction <maximumf>, %106, %cst_50 [1] : vector<16x16xf32> to vector<16xf32>
    %108 = vector.shape_cast %107 : vector<16xf32> to vector<16x1xf32>
    %109 = vector.broadcast %108 : vector<16x1xf32> to vector<16x16xf32>
    %110 = arith.subf %106, %109 : vector<16x16xf32>
    %111 = math.exp %110 : vector<16x16xf32>
    %cst_51 = arith.constant dense<0.000000e+00> : vector<16xf32>
    %112 = vector.multi_reduction <add>, %111, %cst_51 [1] : vector<16x16xf32> to vector<16xf32>
    %113 = vector.shape_cast %112 : vector<16xf32> to vector<16x1xf32>
    %114 = vector.broadcast %113 : vector<16x1xf32> to vector<16x16xf32>
    %115 = arith.divf %111, %114 : vector<16x16xf32>
    %116 = arith.truncf %115 : vector<16x16xf32> to vector<16x16xbf16>
    %117 = vector.broadcast %99 : vector<1x32xf32> to vector<16x32xf32>
    %118 = arith.mulf %28, %117 : vector<16x32xf32>
    %119 = arith.truncf %118 : vector<16x32xf32> to vector<16x32xbf16>
    %cst_52 = arith.constant dense<0.000000e+00> : vector<16x32xf32>
    %120 = tpu.matmul %116, %119, %cst_52 {dimension_numbers = #tpu.dot_dimension_numbers<[1], [0], [0], [1], [0, 0, 1, 1], [], []>} : vector<16x16xbf16>, vector<16x32xbf16>, vector<16x32xf32> -> vector<16x32xf32>
    %121 = arith.addf %91, %120 : vector<16x32xf32>
    %c24_i32_53 = arith.constant 24 : i32
    %122 = vector.broadcast %c24_i32_53 : i32 to vector<1x32xi32>
    %123 = arith.cmpi sge, %29, %122 : vector<1x32xi32>
    %c32_i32 = arith.constant 32 : i32
    %124 = vector.broadcast %c32_i32 : i32 to vector<1x32xi32>
    %125 = arith.cmpi slt, %29, %124 : vector<1x32xi32>
    %126 = arith.andi %123, %125 : vector<1x32xi1>
    %cst_54 = arith.constant 1.000000e+00 : f32
    %cst_55 = arith.constant 0.000000e+00 : f32
    %127 = vector.broadcast %cst_54 : f32 to vector<1x32xf32>
    %128 = vector.broadcast %cst_55 : f32 to vector<1x32xf32>
    %129 = arith.select %126, %127, %128 : vector<1x32xi1>, vector<1x32xf32>
    %130 = vector.broadcast %129 : vector<1x32xf32> to vector<16x32xf32>
    %131 = arith.mulf %12, %130 : vector<16x32xf32>
    %132 = arith.truncf %131 : vector<16x32xf32> to vector<16x32xbf16>
    %cst_56 = arith.constant dense<0.000000e+00> : vector<16x16xf32>
    %133 = tpu.matmul %132, %30, %cst_56 {dimension_numbers = #tpu.dot_dimension_numbers<[1], [1], [0], [0], [0, 0, 1, 0], [], []>} : vector<16x32xbf16>, vector<16x32xbf16>, vector<16x16xf32> -> vector<16x16xf32>
    %cst_57 = arith.constant 0.353553385 : f32
    %134 = vector.broadcast %cst_57 : f32 to vector<16x16xf32>
    %135 = arith.mulf %133, %134 : vector<16x16xf32>
    %136 = arith.addf %135, %4 : vector<16x16xf32>
    %cst_58 = arith.constant dense<0xFF800000> : vector<16xf32>
    %137 = vector.multi_reduction <maximumf>, %136, %cst_58 [1] : vector<16x16xf32> to vector<16xf32>
    %138 = vector.shape_cast %137 : vector<16xf32> to vector<16x1xf32>
    %139 = vector.broadcast %138 : vector<16x1xf32> to vector<16x16xf32>
    %140 = arith.subf %136, %139 : vector<16x16xf32>
    %141 = math.exp %140 : vector<16x16xf32>
    %cst_59 = arith.constant dense<0.000000e+00> : vector<16xf32>
    %142 = vector.multi_reduction <add>, %141, %cst_59 [1] : vector<16x16xf32> to vector<16xf32>
    %143 = vector.shape_cast %142 : vector<16xf32> to vector<16x1xf32>
    %144 = vector.broadcast %143 : vector<16x1xf32> to vector<16x16xf32>
    %145 = arith.divf %141, %144 : vector<16x16xf32>
    %146 = arith.truncf %145 : vector<16x16xf32> to vector<16x16xbf16>
    %147 = vector.broadcast %129 : vector<1x32xf32> to vector<16x32xf32>
    %148 = arith.mulf %28, %147 : vector<16x32xf32>
    %149 = arith.truncf %148 : vector<16x32xf32> to vector<16x32xbf16>
    %cst_60 = arith.constant dense<0.000000e+00> : vector<16x32xf32>
    %150 = tpu.matmul %146, %149, %cst_60 {dimension_numbers = #tpu.dot_dimension_numbers<[1], [0], [0], [1], [0, 0, 1, 1], [], []>} : vector<16x16xbf16>, vector<16x32xbf16>, vector<16x32xf32> -> vector<16x32xf32>
    %151 = arith.addf %121, %150 : vector<16x32xf32>
    %c0_61 = arith.constant 0 : index
    %c3 = arith.constant 3 : index
    %c0_62 = arith.constant 0 : index
    %c0_63 = arith.constant 0 : index
    %152 = vector.load %arg4[%c0_61, %c3, %c0_62, %c0_63] : memref<1x4x32x32xbf16, #tpu.memory_space<vmem>>, vector<1x1x32x32xbf16>
    %153 = vector.shape_cast %152 : vector<1x1x32x32xbf16> to vector<32x32xbf16>
    %154 = arith.truncf %151 : vector<16x32xf32> to vector<16x32xbf16>
    %cst_64 = arith.constant dense<0.000000e+00> : vector<16x32xf32>
    %155 = tpu.matmul %154, %153, %cst_64 {dimension_numbers = #tpu.dot_dimension_numbers<[1], [0], [0], [1], [0, 0, 1, 1], [], []>} : vector<16x32xbf16>, vector<32x32xbf16>, vector<16x32xf32> -> vector<16x32xf32>
    %c0_65 = arith.constant 0 : index
    %c3_66 = arith.constant 3 : index
    %c0_67 = arith.constant 0 : index
    %c0_68 = arith.constant 0 : index
    %156 = vector.load %arg5[%c0_65, %c3_66, %c0_67, %c0_68] : memref<1x4x1x32xf32, #tpu.memory_space<vmem>>, vector<1x1x1x32xf32>
    %157 = vector.shape_cast %156 : vector<1x1x1x32xf32> to vector<1x32xf32>
    %158 = vector.broadcast %157 : vector<1x32xf32> to vector<16x32xf32>
    %159 = arith.addf %155, %158 : vector<16x32xf32>
    %160 = arith.addf %3, %159 : vector<16x32xf32>
    %c0_69 = arith.constant 0 : index
    %c0_70 = arith.constant 0 : index
    %c0_71 = arith.constant 0 : index
    %c0_72 = arith.constant 0 : index
    %161 = vector.load %arg9[%c0_69, %c0_70, %c0_71, %c0_72] : memref<1x5x1x32xf32, #tpu.memory_space<vmem>>, vector<1x1x1x32xf32>
    %162 = vector.shape_cast %161 : vector<1x1x1x32xf32> to vector<1x32xf32>
    %c0_73 = arith.constant 0 : index
    %c1_74 = arith.constant 1 : index
    %c0_75 = arith.constant 0 : index
    %c0_76 = arith.constant 0 : index
    %163 = vector.load %arg9[%c0_73, %c1_74, %c0_75, %c0_76] : memref<1x5x1x32xf32, #tpu.memory_space<vmem>>, vector<1x1x1x32xf32>
    %164 = vector.shape_cast %163 : vector<1x1x1x32xf32> to vector<1x32xf32>
    %cst_77 = arith.constant dense<0.000000e+00> : vector<16xf32>
    %165 = vector.multi_reduction <add>, %160, %cst_77 [1] : vector<16x32xf32> to vector<16xf32>
    %166 = vector.shape_cast %165 : vector<16xf32> to vector<16x1xf32>
    %cst_78 = arith.constant 3.200000e+01 : f32
    %167 = vector.broadcast %cst_78 : f32 to vector<16x1xf32>
    %168 = arith.divf %166, %167 : vector<16x1xf32>
    %169 = vector.broadcast %168 : vector<16x1xf32> to vector<16x32xf32>
    %170 = arith.subf %160, %169 : vector<16x32xf32>
    %171 = arith.mulf %170, %170 : vector<16x32xf32>
    %cst_79 = arith.constant dense<0.000000e+00> : vector<16xf32>
    %172 = vector.multi_reduction <add>, %171, %cst_79 [1] : vector<16x32xf32> to vector<16xf32>
    %173 = vector.shape_cast %172 : vector<16xf32> to vector<16x1xf32>
    %cst_80 = arith.constant 3.200000e+01 : f32
    %174 = vector.broadcast %cst_80 : f32 to vector<16x1xf32>
    %175 = arith.divf %173, %174 : vector<16x1xf32>
    %176 = vector.broadcast %168 : vector<16x1xf32> to vector<16x32xf32>
    %177 = arith.subf %160, %176 : vector<16x32xf32>
    %cst_81 = arith.constant 9.99999996E-13 : f32
    %178 = vector.broadcast %cst_81 : f32 to vector<16x1xf32>
    %179 = arith.addf %175, %178 : vector<16x1xf32>
    %180 = math.rsqrt %179 : vector<16x1xf32>
    %181 = vector.broadcast %180 : vector<16x1xf32> to vector<16x32xf32>
    %182 = arith.mulf %177, %181 : vector<16x32xf32>
    %183 = vector.broadcast %162 : vector<1x32xf32> to vector<16x32xf32>
    %184 = arith.mulf %183, %182 : vector<16x32xf32>
    %185 = vector.broadcast %164 : vector<1x32xf32> to vector<16x32xf32>
    %186 = arith.addf %184, %185 : vector<16x32xf32>
    %c0_82 = arith.constant 0 : index
    %c0_83 = arith.constant 0 : index
    %c0_84 = arith.constant 0 : index
    %187 = vector.load %arg6[%c0_82, %c0_83, %c0_84] : memref<1x32x64xbf16, #tpu.memory_space<vmem>>, vector<1x32x64xbf16>
    %188 = vector.shape_cast %187 : vector<1x32x64xbf16> to vector<32x64xbf16>
    %189 = arith.truncf %186 : vector<16x32xf32> to vector<16x32xbf16>
    %cst_85 = arith.constant dense<0.000000e+00> : vector<16x64xf32>
    %190 = tpu.matmul %189, %188, %cst_85 {dimension_numbers = #tpu.dot_dimension_numbers<[1], [0], [0], [1], [0, 0, 1, 1], [], []>} : vector<16x32xbf16>, vector<32x64xbf16>, vector<16x64xf32> -> vector<16x64xf32>
    %c0_86 = arith.constant 0 : index
    %c0_87 = arith.constant 0 : index
    %c0_88 = arith.constant 0 : index
    %191 = vector.load %arg7[%c0_86, %c0_87, %c0_88] : memref<1x1x64xf32, #tpu.memory_space<vmem>>, vector<1x1x64xf32>
    %192 = vector.shape_cast %191 : vector<1x1x64xf32> to vector<1x64xf32>
    %193 = vector.broadcast %192 : vector<1x64xf32> to vector<16x64xf32>
    %194 = arith.addf %190, %193 : vector<16x64xf32>
    %cst_89 = arith.constant 5.000000e-01 : f32
    %195 = vector.broadcast %cst_89 : f32 to vector<16x64xf32>
    %196 = arith.mulf %194, %195 : vector<16x64xf32>
    %cst_90 = arith.constant 0.707106769 : f32
    %197 = vector.broadcast %cst_90 : f32 to vector<16x64xf32>
    %198 = arith.mulf %194, %197 : vector<16x64xf32>
    %cst_91 = arith.constant 0.000000e+00 : f32
    %199 = vector.broadcast %cst_91 : f32 to vector<16x64xf32>
    %200 = arith.cmpf oge, %198, %199 : vector<16x64xf32>
    %cst_92 = arith.constant 1.000000e+00 : f32
    %cst_93 = arith.constant -1.000000e+00 : f32
    %201 = vector.broadcast %cst_92 : f32 to vector<16x64xf32>
    %202 = vector.broadcast %cst_93 : f32 to vector<16x64xf32>
    %203 = arith.select %200, %201, %202 : vector<16x64xi1>, vector<16x64xf32>
    %204 = math.absf %198 : vector<16x64xf32>
    %cst_94 = arith.constant 0.327591091 : f32
    %205 = vector.broadcast %cst_94 : f32 to vector<16x64xf32>
    %206 = arith.mulf %205, %204 : vector<16x64xf32>
    %cst_95 = arith.constant 1.000000e+00 : f32
    %207 = vector.broadcast %cst_95 : f32 to vector<16x64xf32>
    %208 = arith.addf %207, %206 : vector<16x64xf32>
    %cst_96 = arith.constant 1.000000e+00 : f32
    %209 = vector.broadcast %cst_96 : f32 to vector<16x64xf32>
    %210 = arith.divf %209, %208 : vector<16x64xf32>
    %cst_97 = arith.constant 1.06140542 : f32
    %211 = vector.broadcast %cst_97 : f32 to vector<16x64xf32>
    %212 = arith.mulf %211, %210 : vector<16x64xf32>
    %cst_98 = arith.constant -1.45315206 : f32
    %213 = vector.broadcast %cst_98 : f32 to vector<16x64xf32>
    %214 = arith.addf %212, %213 : vector<16x64xf32>
    %215 = arith.mulf %214, %210 : vector<16x64xf32>
    %cst_99 = arith.constant 1.42141378 : f32
    %216 = vector.broadcast %cst_99 : f32 to vector<16x64xf32>
    %217 = arith.addf %215, %216 : vector<16x64xf32>
    %218 = arith.mulf %217, %210 : vector<16x64xf32>
    %cst_100 = arith.constant -0.284496725 : f32
    %219 = vector.broadcast %cst_100 : f32 to vector<16x64xf32>
    %220 = arith.addf %218, %219 : vector<16x64xf32>
    %221 = arith.mulf %220, %210 : vector<16x64xf32>
    %cst_101 = arith.constant 0.254829586 : f32
    %222 = vector.broadcast %cst_101 : f32 to vector<16x64xf32>
    %223 = arith.addf %221, %222 : vector<16x64xf32>
    %224 = arith.mulf %223, %210 : vector<16x64xf32>
    %cst_102 = arith.constant 0.000000e+00 : f32
    %225 = vector.broadcast %cst_102 : f32 to vector<16x64xf32>
    %226 = arith.subf %225, %204 : vector<16x64xf32>
    %227 = arith.mulf %226, %204 : vector<16x64xf32>
    %228 = math.exp %227 : vector<16x64xf32>
    %229 = arith.mulf %224, %228 : vector<16x64xf32>
    %cst_103 = arith.constant 1.000000e+00 : f32
    %230 = vector.broadcast %cst_103 : f32 to vector<16x64xf32>
    %231 = arith.subf %230, %229 : vector<16x64xf32>
    %232 = arith.mulf %203, %231 : vector<16x64xf32>
    %cst_104 = arith.constant 1.000000e+00 : f32
    %233 = vector.broadcast %cst_104 : f32 to vector<16x64xf32>
    %234 = arith.addf %233, %232 : vector<16x64xf32>
    %235 = arith.mulf %196, %234 : vector<16x64xf32>
    %c0_105 = arith.constant 0 : index
    %c0_106 = arith.constant 0 : index
    %c0_107 = arith.constant 0 : index
    %236 = vector.load %arg8[%c0_105, %c0_106, %c0_107] : memref<1x64x32xbf16, #tpu.memory_space<vmem>>, vector<1x64x32xbf16>
    %237 = vector.shape_cast %236 : vector<1x64x32xbf16> to vector<64x32xbf16>
    %238 = arith.truncf %235 : vector<16x64xf32> to vector<16x64xbf16>
    %cst_108 = arith.constant dense<0.000000e+00> : vector<16x32xf32>
    %239 = tpu.matmul %238, %237, %cst_108 {dimension_numbers = #tpu.dot_dimension_numbers<[1], [0], [0], [1], [0, 0, 1, 1], [], []>} : vector<16x64xbf16>, vector<64x32xbf16>, vector<16x32xf32> -> vector<16x32xf32>
    %c0_109 = arith.constant 0 : index
    %c4 = arith.constant 4 : index
    %c0_110 = arith.constant 0 : index
    %c0_111 = arith.constant 0 : index
    %240 = vector.load %arg9[%c0_109, %c4, %c0_110, %c0_111] : memref<1x5x1x32xf32, #tpu.memory_space<vmem>>, vector<1x1x1x32xf32>
    %241 = vector.shape_cast %240 : vector<1x1x1x32xf32> to vector<1x32xf32>
    %242 = vector.broadcast %241 : vector<1x32xf32> to vector<16x32xf32>
    %243 = arith.addf %239, %242 : vector<16x32xf32>
    %244 = arith.addf %186, %243 : vector<16x32xf32>
    %c0_112 = arith.constant 0 : index
    %c2_113 = arith.constant 2 : index
    %c0_114 = arith.constant 0 : index
    %c0_115 = arith.constant 0 : index
    %245 = vector.load %arg9[%c0_112, %c2_113, %c0_114, %c0_115] : memref<1x5x1x32xf32, #tpu.memory_space<vmem>>, vector<1x1x1x32xf32>
    %246 = vector.shape_cast %245 : vector<1x1x1x32xf32> to vector<1x32xf32>
    %c0_116 = arith.constant 0 : index
    %c3_117 = arith.constant 3 : index
    %c0_118 = arith.constant 0 : index
    %c0_119 = arith.constant 0 : index
    %247 = vector.load %arg9[%c0_116, %c3_117, %c0_118, %c0_119] : memref<1x5x1x32xf32, #tpu.memory_space<vmem>>, vector<1x1x1x32xf32>
    %248 = vector.shape_cast %247 : vector<1x1x1x32xf32> to vector<1x32xf32>
    %cst_120 = arith.constant dense<0.000000e+00> : vector<16xf32>
    %249 = vector.multi_reduction <add>, %244, %cst_120 [1] : vector<16x32xf32> to vector<16xf32>
    %250 = vector.shape_cast %249 : vector<16xf32> to vector<16x1xf32>
    %cst_121 = arith.constant 3.200000e+01 : f32
    %251 = vector.broadcast %cst_121 : f32 to vector<16x1xf32>
    %252 = arith.divf %250, %251 : vector<16x1xf32>
    %253 = vector.broadcast %252 : vector<16x1xf32> to vector<16x32xf32>
    %254 = arith.subf %244, %253 : vector<16x32xf32>
    %255 = arith.mulf %254, %254 : vector<16x32xf32>
    %cst_122 = arith.constant dense<0.000000e+00> : vector<16xf32>
    %256 = vector.multi_reduction <add>, %255, %cst_122 [1] : vector<16x32xf32> to vector<16xf32>
    %257 = vector.shape_cast %256 : vector<16xf32> to vector<16x1xf32>
    %cst_123 = arith.constant 3.200000e+01 : f32
    %258 = vector.broadcast %cst_123 : f32 to vector<16x1xf32>
    %259 = arith.divf %257, %258 : vector<16x1xf32>
    %260 = vector.broadcast %252 : vector<16x1xf32> to vector<16x32xf32>
    %261 = arith.subf %244, %260 : vector<16x32xf32>
    %cst_124 = arith.constant 9.99999996E-13 : f32
    %262 = vector.broadcast %cst_124 : f32 to vector<16x1xf32>
    %263 = arith.addf %259, %262 : vector<16x1xf32>
    %264 = math.rsqrt %263 : vector<16x1xf32>
    %265 = vector.broadcast %264 : vector<16x1xf32> to vector<16x32xf32>
    %266 = arith.mulf %261, %265 : vector<16x32xf32>
    %267 = vector.broadcast %246 : vector<1x32xf32> to vector<16x32xf32>
    %268 = arith.mulf %267, %266 : vector<16x32xf32>
    %269 = vector.broadcast %248 : vector<1x32xf32> to vector<16x32xf32>
    %270 = arith.addf %268, %269 : vector<16x32xf32>
    %c0_125 = arith.constant 0 : index
    %c0_126 = arith.constant 0 : index
    %271 = vector.load %arg15[%c0_125, %c0_126] : memref<16x32xf32, #tpu.memory_space<vmem>>, vector<16x32xf32>
    tpu.vector_store %arg15[%c0_125, %c0_126], %270 {strides = array<i32>} : memref<16x32xf32, #tpu.memory_space<vmem>>, vector<16x32xf32>,
    %c1_i32 = arith.constant 1 : i32
    %272 = arith.cmpi eq, %arg0, %c1_i32 : i32
    %273 = arith.extui %272 : i1 to i32
    %c0_i32_127 = arith.constant 0 : i32
    %274 = arith.cmpi ne, %273, %c0_i32_127 : i32
    scf.if %274 {
      %275 = vector.extract_strided_slice %270 {offsets = [0, 0], sizes = [1, 32], strides = [1, 1]} : vector<16x32xf32> to vector<1x32xf32>
      %276 = vector.extract_strided_slice %270 {offsets = [8, 0], sizes = [1, 32], strides = [1, 1]} : vector<16x32xf32> to vector<1x32xf32>
      %277 = tpu.concatenate %275, %276 in 0 : vector<1x32xf32>, vector<1x32xf32> -> vector<2x32xf32>
      %c0_128 = arith.constant 0 : index
      %c0_129 = arith.constant 0 : index
      %278 = vector.load %arg10[%c0_128, %c0_129] : memref<32x32xbf16, #tpu.memory_space<vmem>>, vector<32x32xbf16>
      %279 = arith.truncf %277 : vector<2x32xf32> to vector<2x32xbf16>
      %cst_130 = arith.constant dense<0.000000e+00> : vector<2x32xf32>
      %280 = tpu.matmul %279, %278, %cst_130 {dimension_numbers = #tpu.dot_dimension_numbers<[1], [0], [0], [1], [0, 0, 1, 1], [], []>} : vector<2x32xbf16>, vector<32x32xbf16>, vector<2x32xf32> -> vector<2x32xf32>
      %c0_131 = arith.constant 0 : index
      %c0_132 = arith.constant 0 : index
      %281 = vector.load %arg11[%c0_131, %c0_132] : memref<1x32xf32, #tpu.memory_space<vmem>>, vector<1x32xf32>
      %282 = vector.broadcast %281 : vector<1x32xf32> to vector<2x32xf32>
      %283 = arith.addf %280, %282 : vector<2x32xf32>
      %284 = math.tanh %283 : vector<2x32xf32>
      %c0_133 = arith.constant 0 : index
      %c0_134 = arith.constant 0 : index
      %285 = vector.load %arg12[%c0_133, %c0_134] : memref<32x2xbf16, #tpu.memory_space<vmem>>, vector<32x2xbf16>
      %286 = arith.truncf %284 : vector<2x32xf32> to vector<2x32xbf16>
      %cst_135 = arith.constant dense<0.000000e+00> : vector<2x2xf32>
      %287 = tpu.matmul %286, %285, %cst_135 {dimension_numbers = #tpu.dot_dimension_numbers<[1], [0], [0], [1], [0, 0, 1, 1], [], []>} : vector<2x32xbf16>, vector<32x2xbf16>, vector<2x2xf32> -> vector<2x2xf32>
      %c0_136 = arith.constant 0 : index
      %c0_137 = arith.constant 0 : index
      %288 = vector.load %arg13[%c0_136, %c0_137] : memref<1x2xf32, #tpu.memory_space<vmem>>, vector<1x2xf32>
      %289 = vector.broadcast %288 : vector<1x2xf32> to vector<2x2xf32>
      %290 = arith.addf %287, %289 : vector<2x2xf32>
      %c0_138 = arith.constant 0 : index
      %c0_139 = arith.constant 0 : index
      %291 = vector.load %arg14[%c0_138, %c0_139] : memref<2x2xf32, #tpu.memory_space<vmem>>, vector<2x2xf32>
      tpu.vector_store %arg14[%c0_138, %c0_139], %290 {strides = array<i32>} : memref<2x2xf32, #tpu.memory_space<vmem>>, vector<2x2xf32>,
    } else {
    }
    return
  }
  func.func @transform_0(%arg0: i32) -> (i32, i32) {
    %c0_i32 = arith.constant 0 : i32
    %c0_i32_0 = arith.constant 0 : i32
    %c0_i32_1 = arith.constant 0 : i32
    return %c0_i32, %c0_i32_0 : i32, i32
  }
  func.func @transform_1(%arg0: i32) -> (i32, i32) {
    %c0_i32 = arith.constant 0 : i32
    %c0_i32_0 = arith.constant 0 : i32
    %c0_i32_1 = arith.constant 0 : i32
    return %c0_i32, %c0_i32_0 : i32, i32
  }
  func.func @transform_2(%arg0: i32) -> (i32, i32, i32) {
    %c0_i32 = arith.constant 0 : i32
    %c0_i32_0 = arith.constant 0 : i32
    %c0_i32_1 = arith.constant 0 : i32
    %c0_i32_2 = arith.constant 0 : i32
    return %c0_i32, %c0_i32_0, %c0_i32_1 : i32, i32, i32
  }
  func.func @transform_3(%arg0: i32) -> (i32, i32, i32, i32) {
    %c0_i32 = arith.constant 0 : i32
    %c0_i32_0 = arith.constant 0 : i32
    %c0_i32_1 = arith.constant 0 : i32
    %c0_i32_2 = arith.constant 0 : i32
    return %arg0, %c0_i32, %c0_i32_0, %c0_i32_1 : i32, i32, i32, i32
  }
  func.func @transform_4(%arg0: i32) -> (i32, i32, i32, i32) {
    %c0_i32 = arith.constant 0 : i32
    %c0_i32_0 = arith.constant 0 : i32
    %c0_i32_1 = arith.constant 0 : i32
    %c0_i32_2 = arith.constant 0 : i32
    return %arg0, %c0_i32, %c0_i32_0, %c0_i32_1 : i32, i32, i32, i32
  }
  func.func @transform_5(%arg0: i32) -> (i32, i32, i32) {
    %c0_i32 = arith.constant 0 : i32
    %c0_i32_0 = arith.constant 0 : i32
    %c0_i32_1 = arith.constant 0 : i32
    return %arg0, %c0_i32, %c0_i32_0 : i32, i32, i32
  }
  func.func @transform_6(%arg0: i32) -> (i32, i32, i32) {
    %c0_i32 = arith.constant 0 : i32
    %c0_i32_0 = arith.constant 0 : i32
    %c0_i32_1 = arith.constant 0 : i32
    return %arg0, %c0_i32, %c0_i32_0 : i32, i32, i32
  }
  func.func @transform_7(%arg0: i32) -> (i32, i32, i32) {
    %c0_i32 = arith.constant 0 : i32
    %c0_i32_0 = arith.constant 0 : i32
    %c0_i32_1 = arith.constant 0 : i32
    return %arg0, %c0_i32, %c0_i32_0 : i32, i32, i32
  }
  func.func @transform_8(%arg0: i32) -> (i32, i32, i32, i32) {
    %c0_i32 = arith.constant 0 : i32
    %c0_i32_0 = arith.constant 0 : i32
    %c0_i32_1 = arith.constant 0 : i32
    %c0_i32_2 = arith.constant 0 : i32
    return %arg0, %c0_i32, %c0_i32_0, %c0_i32_1 : i32, i32, i32, i32
  }
  func.func @transform_9(%arg0: i32) -> (i32, i32) {
    %c0_i32 = arith.constant 0 : i32
    %c0_i32_0 = arith.constant 0 : i32
    %c0_i32_1 = arith.constant 0 : i32
    return %c0_i32, %c0_i32_0 : i32, i32
  }
  func.func @transform_10(%arg0: i32) -> (i32, i32) {
    %c0_i32 = arith.constant 0 : i32
    %c0_i32_0 = arith.constant 0 : i32
    %c0_i32_1 = arith.constant 0 : i32
    return %c0_i32, %c0_i32_0 : i32, i32
  }
  func.func @transform_11(%arg0: i32) -> (i32, i32) {
    %c0_i32 = arith.constant 0 : i32
    %c0_i32_0 = arith.constant 0 : i32
    %c0_i32_1 = arith.constant 0 : i32
    return %c0_i32, %c0_i32_0 : i32, i32
  }
  func.func @transform_12(%arg0: i32) -> (i32, i32) {
    %c0_i32 = arith.constant 0 : i32
    %c0_i32_0 = arith.constant 0 : i32
    %c0_i32_1 = arith.constant 0 : i32
    return %c0_i32, %c0_i32_0 : i32, i32
  }
  func.func @transform_13(%arg0: i32) -> (i32, i32) {
    %c0_i32 = arith.constant 0 : i32
    %c0_i32_0 = arith.constant 0 : i32
    %c0_i32_1 = arith.constant 0 : i32
    return %c0_i32, %c0_i32_0 : i32, i32
  }
}

</mosaic_0001>

<llo_original>
// kernel: tpu_custom_call.1
$region0: #{tpu_custom_call.1}
  #allocation0 [shape = 'u32[]', space=smem, size = 0x4, offset = 0x4, fixed_abs, tag = 'smem constant byte address 0x4 - core index']
  #allocation1 [shape = 'u32[144,128]{1,0:T(1,128)}', space=vmem, size = 0x12000, scoped, tag = 'internal scratch']
  #allocation2 [shape = 'f32[16,32]{1,0:T(8,128)}', space=vmem, size = 0x2000, scoped, tag = 'scratch operand']
  %s0 = inlined_call_operand.vmem [shape: f32[16,32], index: 0, kind: input, shape index: {}]
  %s1 = inlined_call_operand.vmem [shape: f32[16,16], index: 1, kind: input, shape index: {}]
  %s2 = inlined_call_operand.vmem [shape: f32[2,1,32], index: 2, kind: input, shape index: {}]
  %s3 = inlined_call_operand.hbm [shape: bf16[2,4,32,32], index: 3, kind: input, shape index: {}]
  %s4 = inlined_call_operand.vmem [shape: f32[2,4,1,32], index: 4, kind: input, shape index: {}]
  %s5 = inlined_call_operand.vmem [shape: bf16[2,32,64], index: 5, kind: input, shape index: {}]
  %s6 = inlined_call_operand.vmem [shape: f32[2,1,64], index: 6, kind: input, shape index: {}]
  %s7 = inlined_call_operand.vmem [shape: bf16[2,64,32], index: 7, kind: input, shape index: {}]
  %s8 = inlined_call_operand.vmem [shape: f32[2,5,1,32], index: 8, kind: input, shape index: {}]
  %s9 = inlined_call_operand.vmem [shape: bf16[32,32], index: 9, kind: input, shape index: {}]
  %s10 = inlined_call_operand.vmem [shape: f32[1,32], index: 10, kind: input, shape index: {}]
  %s11 = inlined_call_operand.vmem [shape: bf16[32,2], index: 11, kind: input, shape index: {}]
  %s12 = inlined_call_operand.vmem [shape: f32[1,2], index: 12, kind: input, shape index: {}]
  %s13 = inlined_call_operand.hbm [shape: f32[2,2], index: 13, kind: output, shape index: {}]
  %s14 = sld [smem:[#allocation0]]
  $region97: #{tpu_custom_call.1} parent=0
    _
  %s16 = ssub.s32 1, %s14
  %s17 = scalar_select 0, %s16, %s14
  $region1: #{tpu_custom_call.1} parent=0
    #allocation3 [shape = 'u8[65536]{0}', space=vmem, size = 0x10000, scoped, tag = 'input window, operand 3']
    #allocation4 [shape = 's32[2]{0}', space=sflag, size = 0x8, scoped, tag = 'scoped memory for tpu_custom_call.1']
    #allocation5 [shape = 's32[2]{0}', space=sflag, size = 0x8, scoped, tag = 'scoped memory for tpu_custom_call.1']
    #allocation6 [shape = 'u8[1024]{0}', space=vmem, size = 0x400, scoped, tag = 'output window, operand 0, single buffered']
    %18 = vsyncpa [#allocation4], 0
    %s19 = scalar_lea.sflag [#allocation4], 1
    %20 = vsyncpa %s19, 0
    %21 = vsyncpa [#allocation5], 0
    loop: start=0, step=1, limit=4
    $region2: #{tpu_custom_call.1} parent=1 // loop_pre_header
      _
    $region3: #{tpu_custom_call.1} parent=1 // loop_header
      %s23 = sphi 0, %s27
      %p24 = scmp.ge.s32.totalorder %s23, 4
      %s31 = sphi 0, %s31
      %s33 = sphi 0, %s31
      %s34 = sphi 0, %s33
      %s48 = sphi 0, %s34
      %s52 = sphi 0, %s52
      %s54 = sphi 0, %s52
      %s55 = sphi 0, %s54
      %s69 = sphi 0, %s55
      %s73 = sphi 0, %s73
      %s75 = sphi 0, %s73
      %s76 = sphi 0, %s75
      %s90 = sphi 0, %s76
      %s96 = sphi 0, %s98
      %s99 = sphi 0, %s96
      %s100 = sphi 0, %s99
      %s116 = sphi 0, %s100
      %s122 = sphi 0, %s124
      %s125 = sphi 0, %s122
      %s126 = sphi 0, %s125
      %s142 = sphi 0, %s126
      %s148 = sphi 0, %s150
      %s151 = sphi 0, %s148
      %s152 = sphi 0, %s151
      %s168 = sphi 0, %s152
      %s174 = sphi 0, %s176
      %s177 = sphi 0, %s174
      %s178 = sphi 0, %s177
      %s194 = sphi 0, %s178
      %s200 = sphi 0, %s202
      %s203 = sphi 0, %s200
      %s204 = sphi 0, %s203
      %s220 = sphi 0, %s204
      %s226 = sphi 0, %s228
      %s229 = sphi 0, %s226
      %s230 = sphi 0, %s229
      %s246 = sphi 0, %s230
      %s250 = sphi 0, %s250
      %s252 = sphi 0, %s250
      %s253 = sphi 0, %s252
      %s267 = sphi 0, %s253
      %s271 = sphi 0, %s271
      %s273 = sphi 0, %s271
      %s274 = sphi 0, %s273
      %s288 = sphi 0, %s274
      %s292 = sphi 0, %s292
      %s294 = sphi 0, %s292
      %s295 = sphi 0, %s294
      %s309 = sphi 0, %s295
      %s313 = sphi 0, %s313
      %s315 = sphi 0, %s313
      %s316 = sphi 0, %s315
      %s330 = sphi 0, %s316
      %s334 = sphi 0, %s334
      %s336 = sphi 0, %s334
      %s337 = sphi 0, %s336
      %s351 = sphi 0, %s337
    $region4: #{tpu_custom_call.1} parent=1 // loop_header_branch
      %26 = sbr.rel (%p24) target = $region8
    $region5: #{tpu_custom_call.1} parent=1 // loop_body
      %s28 = ssub.s32 %s23, 1
      %s29 = ssub.s32 %s23, 2
      %s30 = sadd.s32 %s23, 1
      %s32 = sadd.s32 %s31, 1
      %p35 = scmp.eq.s32.totalorder %s23, 1
      %p36 = scmp.ne.s32.totalorder %s31, %s33
      %p37 = scmp.eq.s32.totalorder %s23, 0
      %p38 = por %p36, %p37
      %p39 = scmp.ne.s32.totalorder %s31, %s33
      %p40 = scmp.eq.s32.totalorder %s28, 1
      %p41 = por %p39, %p40
      %p42 = scmp.ne.s32.totalorder %s33, %s34
      %p43 = scmp.eq.s32.totalorder %s28, 0
      %p44 = por %p42, %p43
      %p45 = scmp.ne.s32.totalorder %s33, %s34
      %p46 = scmp.eq.s32.totalorder %s29, 1
      %p47 = por %p45, %p46
      %p49 = scmp.ne.s32.totalorder %s34, %s48
      %p50 = scmp.eq.s32.totalorder %s29, 0
      %p51 = por %p49, %p50
      %s53 = sadd.s32 %s52, 1
      %p56 = scmp.eq.s32.totalorder %s23, 1
      %p57 = scmp.ne.s32.totalorder %s52, %s54
      %p58 = scmp.eq.s32.totalorder %s23, 0
      %p59 = por %p57, %p58
      %p60 = scmp.ne.s32.totalorder %s52, %s54
      %p61 = scmp.eq.s32.totalorder %s28, 1
      %p62 = por %p60, %p61
      %p63 = scmp.ne.s32.totalorder %s54, %s55
      %p64 = scmp.eq.s32.totalorder %s28, 0
      %p65 = por %p63, %p64
      %p66 = scmp.ne.s32.totalorder %s54, %s55
      %p67 = scmp.eq.s32.totalorder %s29, 1
      %p68 = por %p66, %p67
      %p70 = scmp.ne.s32.totalorder %s55, %s69
      %p71 = scmp.eq.s32.totalorder %s29, 0
      %p72 = por %p70, %p71
      %s74 = sadd.s32 %s73, 1
      %p77 = scmp.eq.s32.totalorder %s23, 1
      %p78 = scmp.ne.s32.totalorder %s73, %s75
      %p79 = scmp.eq.s32.totalorder %s23, 0
      %p80 = por %p78, %p79
      %p81 = scmp.ne.s32.totalorder %s73, %s75
      %p82 = scmp.eq.s32.totalorder %s28, 1
      %p83 = por %p81, %p82
      %p84 = scmp.ne.s32.totalorder %s75, %s76
      %p85 = scmp.eq.s32.totalorder %s28, 0
      %p86 = por %p84, %p85
      %p87 = scmp.ne.s32.totalorder %s75, %s76
      %p88 = scmp.eq.s32.totalorder %s29, 1
      %p89 = por %p87, %p88
      %p91 = scmp.ne.s32.totalorder %s76, %s90
      %p92 = scmp.eq.s32.totalorder %s29, 0
      %p93 = por %p91, %p92
      %s94 = ssub.s32 %s23, %s30
      %p95 = scmp.eq.s32.totalorder %s94, 0
      %s97 = sadd.s32 %s96, 1
      %s98 = scalar_select %p95, %s96, %s97
      %p101 = pneg %p95
      %p102 = scmp.eq.s32.totalorder %s23, 1
      %p103 = por %p101, %p102
      %p104 = scmp.ne.s32.totalorder %s96, %s99
      %p105 = scmp.eq.s32.totalorder %s23, 0
      %p106 = por %p104, %p105
      %p107 = scmp.ne.s32.totalorder %s96, %s99
      %p108 = scmp.eq.s32.totalorder %s28, 1
      %p109 = por %p107, %p108
      %p110 = scmp.ne.s32.totalorder %s99, %s100
      %p111 = scmp.eq.s32.totalorder %s28, 0
      %p112 = por %p110, %p111
      %p113 = scmp.ne.s32.totalorder %s99, %s100
      %p114 = scmp.eq.s32.totalorder %s29, 1
      %p115 = por %p113, %p114
      %p117 = scmp.ne.s32.totalorder %s100, %s116
      %p118 = scmp.eq.s32.totalorder %s29, 0
      %p119 = por %p117, %p118
      %s120 = ssub.s32 %s23, %s30
      %p121 = scmp.eq.s32.totalorder %s120, 0
      %s123 = sadd.s32 %s122, 1
      %s124 = scalar_select %p121, %s122, %s123
      %p127 = pneg %p121
      %p128 = scmp.eq.s32.totalorder %s23, 1
      %p129 = por %p127, %p128
      %p130 = scmp.ne.s32.totalorder %s122, %s125
      %p131 = scmp.eq.s32.totalorder %s23, 0
      %p132 = por %p130, %p131
      %p133 = scmp.ne.s32.totalorder %s122, %s125
      %p134 = scmp.eq.s32.totalorder %s28, 1
      %p135 = por %p133, %p134
      %p136 = scmp.ne.s32.totalorder %s125, %s126
      %p137 = scmp.eq.s32.totalorder %s28, 0
      %p138 = por %p136, %p137
      %p139 = scmp.ne.s32.totalorder %s125, %s126
      %p140 = scmp.eq.s32.totalorder %s29, 1
      %p141 = por %p139, %p140
      %p143 = scmp.ne.s32.totalorder %s126, %s142
      %p144 = scmp.eq.s32.totalorder %s29, 0
      %p145 = por %p143, %p144
      %s146 = ssub.s32 %s23, %s30
      %p147 = scmp.eq.s32.totalorder %s146, 0
      %s149 = sadd.s32 %s148, 1
      %s150 = scalar_select %p147, %s148, %s149
      %p153 = pneg %p147
      %p154 = scmp.eq.s32.totalorder %s23, 1
      %p155 = por %p153, %p154
      %p156 = scmp.ne.s32.totalorder %s148, %s151
      %p157 = scmp.eq.s32.totalorder %s23, 0
      %p158 = por %p156, %p157
      %p159 = scmp.ne.s32.totalorder %s148, %s151
      %p160 = scmp.eq.s32.totalorder %s28, 1
      %p161 = por %p159, %p160
      %p162 = scmp.ne.s32.totalorder %s151, %s152
      %p163 = scmp.eq.s32.totalorder %s28, 0
      %p164 = por %p162, %p163
      %p165 = scmp.ne.s32.totalorder %s151, %s152
      %p166 = scmp.eq.s32.totalorder %s29, 1
      %p167 = por %p165, %p166
      %p169 = scmp.ne.s32.totalorder %s152, %s168
      %p170 = scmp.eq.s32.totalorder %s29, 0
      %p171 = por %p169, %p170
      %s172 = ssub.s32 %s23, %s30
      %p173 = scmp.eq.s32.totalorder %s172, 0
      %s175 = sadd.s32 %s174, 1
      %s176 = scalar_select %p173, %s174, %s175
      %p179 = pneg %p173
      %p180 = scmp.eq.s32.totalorder %s23, 1
      %p181 = por %p179, %p180
      %p182 = scmp.ne.s32.totalorder %s174, %s177
      %p183 = scmp.eq.s32.totalorder %s23, 0
      %p184 = por %p182, %p183
      %p185 = scmp.ne.s32.totalorder %s174, %s177
      %p186 = scmp.eq.s32.totalorder %s28, 1
      %p187 = por %p185, %p186
      %p188 = scmp.ne.s32.totalorder %s177, %s178
      %p189 = scmp.eq.s32.totalorder %s28, 0
      %p190 = por %p188, %p189
      %p191 = scmp.ne.s32.totalorder %s177, %s178
      %p192 = scmp.eq.s32.totalorder %s29, 1
      %p193 = por %p191, %p192
      %p195 = scmp.ne.s32.totalorder %s178, %s194
      %p196 = scmp.eq.s32.totalorder %s29, 0
      %p197 = por %p195, %p196
      %s198 = ssub.s32 %s23, %s30
      %p199 = scmp.eq.s32.totalorder %s198, 0
      %s201 = sadd.s32 %s200, 1
      %s202 = scalar_select %p199, %s200, %s201
      %p205 = pneg %p199
      %p206 = scmp.eq.s32.totalorder %s23, 1
      %p207 = por %p205, %p206
      %p208 = scmp.ne.s32.totalorder %s200, %s203
      %p209 = scmp.eq.s32.totalorder %s23, 0
      %p210 = por %p208, %p209
      %p211 = scmp.ne.s32.totalorder %s200, %s203
      %p212 = scmp.eq.s32.totalorder %s28, 1
      %p213 = por %p211, %p212
      %p214 = scmp.ne.s32.totalorder %s203, %s204
      %p215 = scmp.eq.s32.totalorder %s28, 0
      %p216 = por %p214, %p215
      %p217 = scmp.ne.s32.totalorder %s203, %s204
      %p218 = scmp.eq.s32.totalorder %s29, 1
      %p219 = por %p217, %p218
      %p221 = scmp.ne.s32.totalorder %s204, %s220
      %p222 = scmp.eq.s32.totalorder %s29, 0
      %p223 = por %p221, %p222
      %s224 = ssub.s32 %s23, %s30
      %p225 = scmp.eq.s32.totalorder %s224, 0
      %s227 = sadd.s32 %s226, 1
      %s228 = scalar_select %p225, %s226, %s227
      %p231 = pneg %p225
      %p232 = scmp.eq.s32.totalorder %s23, 1
      %p233 = por %p231, %p232
      %p234 = scmp.ne.s32.totalorder %s226, %s229
      %p235 = scmp.eq.s32.totalorder %s23, 0
      %p236 = por %p234, %p235
      %p237 = scmp.ne.s32.totalorder %s226, %s229
      %p238 = scmp.eq.s32.totalorder %s28, 1
      %p239 = por %p237, %p238
      %p240 = scmp.ne.s32.totalorder %s229, %s230
      %p241 = scmp.eq.s32.totalorder %s28, 0
      %p242 = por %p240, %p241
      %p243 = scmp.ne.s32.totalorder %s229, %s230
      %p244 = scmp.eq.s32.totalorder %s29, 1
      %p245 = por %p243, %p244
      %p247 = scmp.ne.s32.totalorder %s230, %s246
      %p248 = scmp.eq.s32.totalorder %s29, 0
      %p249 = por %p247, %p248
      %s251 = sadd.s32 %s250, 1
      %p254 = scmp.eq.s32.totalorder %s23, 1
      %p255 = scmp.ne.s32.totalorder %s250, %s252
      %p256 = scmp.eq.s32.totalorder %s23, 0
      %p257 = por %p255, %p256
      %p258 = scmp.ne.s32.totalorder %s250, %s252
      %p259 = scmp.eq.s32.totalorder %s28, 1
      %p260 = por %p258, %p259
      %p261 = scmp.ne.s32.totalorder %s252, %s253
      %p262 = scmp.eq.s32.totalorder %s28, 0
      %p263 = por %p261, %p262
      %p264 = scmp.ne.s32.totalorder %s252, %s253
      %p265 = scmp.eq.s32.totalorder %s29, 1
      %p266 = por %p264, %p265
      %p268 = scmp.ne.s32.totalorder %s253, %s267
      %p269 = scmp.eq.s32.totalorder %s29, 0
      %p270 = por %p268, %p269
      %s272 = sadd.s32 %s271, 1
      %p275 = scmp.eq.s32.totalorder %s23, 1
      %p276 = scmp.ne.s32.totalorder %s271, %s273
      %p277 = scmp.eq.s32.totalorder %s23, 0
      %p278 = por %p276, %p277
      %p279 = scmp.ne.s32.totalorder %s271, %s273
      %p280 = scmp.eq.s32.totalorder %s28, 1
      %p281 = por %p279, %p280
      %p282 = scmp.ne.s32.totalorder %s273, %s274
      %p283 = scmp.eq.s32.totalorder %s28, 0
      %p284 = por %p282, %p283
      %p285 = scmp.ne.s32.totalorder %s273, %s274
      %p286 = scmp.eq.s32.totalorder %s29, 1
      %p287 = por %p285, %p286
      %p289 = scmp.ne.s32.totalorder %s274, %s288
      %p290 = scmp.eq.s32.totalorder %s29, 0
      %p291 = por %p289, %p290
      %s293 = sadd.s32 %s292, 1
      %p296 = scmp.eq.s32.totalorder %s23, 1
      %p297 = scmp.ne.s32.totalorder %s292, %s294
      %p298 = scmp.eq.s32.totalorder %s23, 0
      %p299 = por %p297, %p298
      %p300 = scmp.ne.s32.totalorder %s292, %s294
      %p301 = scmp.eq.s32.totalorder %s28, 1
      %p302 = por %p300, %p301
      %p303 = scmp.ne.s32.totalorder %s294, %s295
      %p304 = scmp.eq.s32.totalorder %s28, 0
      %p305 = por %p303, %p304
      %p306 = scmp.ne.s32.totalorder %s294, %s295
      %p307 = scmp.eq.s32.totalorder %s29, 1
      %p308 = por %p306, %p307
      %p310 = scmp.ne.s32.totalorder %s295, %s309
      %p311 = scmp.eq.s32.totalorder %s29, 0
      %p312 = por %p310, %p311
      %s314 = sadd.s32 %s313, 1
      %p317 = scmp.eq.s32.totalorder %s23, 1
      %p318 = scmp.ne.s32.totalorder %s313, %s315
      %p319 = scmp.eq.s32.totalorder %s23, 0
      %p320 = por %p318, %p319
      %p321 = scmp.ne.s32.totalorder %s313, %s315
      %p322 = scmp.eq.s32.totalorder %s28, 1
      %p323 = por %p321, %p322
      %p324 = scmp.ne.s32.totalorder %s315, %s316
      %p325 = scmp.eq.s32.totalorder %s28, 0
      %p326 = por %p324, %p325
      %p327 = scmp.ne.s32.totalorder %s315, %s316
      %p328 = scmp.eq.s32.totalorder %s29, 1
      %p329 = por %p327, %p328
      %p331 = scmp.ne.s32.totalorder %s316, %s330
      %p332 = scmp.eq.s32.totalorder %s29, 0
      %p333 = por %p331, %p332
      %s335 = sadd.s32 %s334, 1
      %p338 = scmp.eq.s32.totalorder %s23, 1
      %p339 = scmp.ne.s32.totalorder %s334, %s336
      %p340 = scmp.eq.s32.totalorder %s23, 0
      %p341 = por %p339, %p340
      %p342 = scmp.ne.s32.totalorder %s334, %s336
      %p343 = scmp.eq.s32.totalorder %s28, 1
      %p344 = por %p342, %p343
      %p345 = scmp.ne.s32.totalorder %s336, %s337
      %p346 = scmp.eq.s32.totalorder %s28, 0
      %p347 = por %p345, %p346
      %p348 = scmp.ne.s32.totalorder %s336, %s337
      %p349 = scmp.eq.s32.totalorder %s29, 1
      %p350 = por %p348, %p349
      %p352 = scmp.ne.s32.totalorder %s337, %s351
      %p353 = scmp.eq.s32.totalorder %s29, 0
      %p354 = por %p352, %p353
      %p355 = scmp.le.s32.totalorder 1, %s23
      %p356 = scmp.lt.s32.totalorder %s23, 3
      %p357 = pnand %p355, %p356
      %p358 = pneg %p357
      // Predicated region
      $region9: #{tpu_custom_call.1} parent=5 // pred_check
        _
      $region10: #{tpu_custom_call.1} parent=5 // pred_check_branch
        %360 = sbr.rel (%p357) target = $region12
      $region11: #{tpu_custom_call.1} parent=5 // pred_region
        %s361 = ssub.s32 %s23, 1
        // Predicated region
        $region13: #{tpu_custom_call.1} parent=11 // pred_check
          %p362 = pneg %p44
        $region14: #{tpu_custom_call.1} parent=11 // pred_check_branch
          %364 = sbr.rel (%p362) target = $region16
        $region15: #{tpu_custom_call.1} parent=11 // pred_region
          _
        $region16: #{tpu_custom_call.1} parent=11 // pred_fallthru
          _
        // Predicated region
        $region17: #{tpu_custom_call.1} parent=11 // pred_check
          %p365 = pneg %p65
        $region18: #{tpu_custom_call.1} parent=11 // pred_check_branch
          %367 = sbr.rel (%p365) target = $region20
        $region19: #{tpu_custom_call.1} parent=11 // pred_region
          _
        $region20: #{tpu_custom_call.1} parent=11 // pred_fallthru
          _
        // Predicated region
        $region21: #{tpu_custom_call.1} parent=11 // pred_check
          %p368 = pneg %p86
        $region22: #{tpu_custom_call.1} parent=11 // pred_check_branch
          %370 = sbr.rel (%p368) target = $region24
        $region23: #{tpu_custom_call.1} parent=11 // pred_region
          _
        $region24: #{tpu_custom_call.1} parent=11 // pred_fallthru
          _
        // Predicated region
        $region25: #{tpu_custom_call.1} parent=11 // pred_check
          %p371 = pneg %p263
        $region26: #{tpu_custom_call.1} parent=11 // pred_check_branch
          %373 = sbr.rel (%p371) target = $region28
        $region27: #{tpu_custom_call.1} parent=11 // pred_region
          _
        $region28: #{tpu_custom_call.1} parent=11 // pred_fallthru
          _
        // Predicated region
        $region29: #{tpu_custom_call.1} parent=11 // pred_check
          %p374 = pneg %p284
        $region30: #{tpu_custom_call.1} parent=11 // pred_check_branch
          %376 = sbr.rel (%p374) target = $region32
        $region31: #{tpu_custom_call.1} parent=11 // pred_region
          _
        $region32: #{tpu_custom_call.1} parent=11 // pred_fallthru
          _
        // Predicated region
        $region33: #{tpu_custom_call.1} parent=11 // pred_check
          %p377 = pneg %p305
        $region34: #{tpu_custom_call.1} parent=11 // pred_check_branch
          %379 = sbr.rel (%p377) target = $region36
        $region35: #{tpu_custom_call.1} parent=11 // pred_region
          _
        $region36: #{tpu_custom_call.1} parent=11 // pred_fallthru
          _
        // Predicated region
        $region37: #{tpu_custom_call.1} parent=11 // pred_check
          %p380 = pneg %p326
        $region38: #{tpu_custom_call.1} parent=11 // pred_check_branch
          %382 = sbr.rel (%p380) target = $region40
        $region39: #{tpu_custom_call.1} parent=11 // pred_region
          _
        $region40: #{tpu_custom_call.1} parent=11 // pred_fallthru
          _
      $region12: #{tpu_custom_call.1} parent=5 // pred_fallthru
        _
      %p383 = scmp.lt.s32.totalorder %s23, 2
      // Predicated region
      $region41: #{tpu_custom_call.1} parent=5 // pred_check
        %p384 = pneg %p383
      $region42: #{tpu_custom_call.1} parent=5 // pred_check_branch
        %386 = sbr.rel (%p384) target = $region44
      $region43: #{tpu_custom_call.1} parent=5 // pred_region
        // Predicated region
        $region45: #{tpu_custom_call.1} parent=43 // pred_check
          %p387 = pneg %p106
        $region46: #{tpu_custom_call.1} parent=43 // pred_check_branch
          %389 = sbr.rel (%p387) target = $region48
        $region47: #{tpu_custom_call.1} parent=43 // pred_region
          %s390 = sand.u32 %s96, 1
          %s391 = scalar_lea.sflag [#allocation4], %s390
          %s392 = sand.u32 %s96, 1
          %s393 = smul.addr %s392, 64
          %s394 = scalar_lea.vmem [#allocation3], %s393
          %s396 = ssub.s32 1024, 1024
          %397 = vsyncadd %s391, %s396
          %s398 = smul.addr %s23, 16
          %s399 = smul.addr %s398, 64
          %s400 = scalar_lea.hbm %s3, %s399
          %s401 = sshll.u32 %s394, 4
          %s402 = int_to_ptr.vmem [resolvable:$true] %s401
          %407 = dma.hbm_to_vmem [thread:$0]  %s400, 1024, %s402, %s391, 64, 64, 4
        $region48: #{tpu_custom_call.1} parent=43 // pred_fallthru
          _
        // Predicated region
        $region49: #{tpu_custom_call.1} parent=43 // pred_check
          %p408 = pneg %p132
        $region50: #{tpu_custom_call.1} parent=43 // pred_check_branch
          %410 = sbr.rel (%p408) target = $region52
        $region51: #{tpu_custom_call.1} parent=43 // pred_region
          %p411 = scmp.lt.s32.totalorder %s23, 1
          %s412 = scalar_select %p411, %s23, 1
          %s413 = smul.addr %s412, 4
          %s414 = scalar_lea.vmem %s4, %s413
        $region52: #{tpu_custom_call.1} parent=43 // pred_fallthru
          _
        // Predicated region
        $region53: #{tpu_custom_call.1} parent=43 // pred_check
          %p415 = pneg %p158
        $region54: #{tpu_custom_call.1} parent=43 // pred_check_branch
          %417 = sbr.rel (%p415) target = $region56
        $region55: #{tpu_custom_call.1} parent=43 // pred_region
          %p418 = scmp.lt.s32.totalorder %s23, 1
          %s419 = scalar_select %p418, %s23, 1
          %s420 = smul.addr %s419, 4
          %s421 = smul.addr %s420, 4
          %s422 = scalar_lea.vmem %s5, %s421
        $region56: #{tpu_custom_call.1} parent=43 // pred_fallthru
          _
        // Predicated region
        $region57: #{tpu_custom_call.1} parent=43 // pred_check
          %p423 = pneg %p184
        $region58: #{tpu_custom_call.1} parent=43 // pred_check_branch
          %425 = sbr.rel (%p423) target = $region60
        $region59: #{tpu_custom_call.1} parent=43 // pred_region
          %p426 = scmp.lt.s32.totalorder %s23, 1
          %s427 = scalar_select %p426, %s23, 1
          %s428 = scalar_lea.vmem %s6, %s427
        $region60: #{tpu_custom_call.1} parent=43 // pred_fallthru
          _
        // Predicated region
        $region61: #{tpu_custom_call.1} parent=43 // pred_check
          %p429 = pneg %p210
        $region62: #{tpu_custom_call.1} parent=43 // pred_check_branch
          %431 = sbr.rel (%p429) target = $region64
        $region63: #{tpu_custom_call.1} parent=43 // pred_region
          %p432 = scmp.lt.s32.totalorder %s23, 1
          %s433 = scalar_select %p432, %s23, 1
          %s434 = smul.addr %s433, 8
          %s435 = smul.addr %s434, 4
          %s436 = scalar_lea.vmem %s7, %s435
        $region64: #{tpu_custom_call.1} parent=43 // pred_fallthru
          _
        // Predicated region
        $region65: #{tpu_custom_call.1} parent=43 // pred_check
          %p437 = pneg %p236
        $region66: #{tpu_custom_call.1} parent=43 // pred_check_branch
          %439 = sbr.rel (%p437) target = $region68
        $region67: #{tpu_custom_call.1} parent=43 // pred_region
          %p440 = scmp.lt.s32.totalorder %s23, 1
          %s441 = scalar_select %p440, %s23, 1
          %s442 = smul.addr %s441, 5
          %s443 = scalar_lea.vmem %s8, %s442
        $region68: #{tpu_custom_call.1} parent=43 // pred_fallthru
          _
      $region44: #{tpu_custom_call.1} parent=5 // pred_fallthru
        _
      %p444 = scmp.le.s32.totalorder 1, %s23
      %p445 = scmp.lt.s32.totalorder %s23, 3
      %p446 = pnand %p444, %p445
      %p447 = pneg %p446
      // Predicated region
      $region69: #{tpu_custom_call.1} parent=5 // pred_check
        _
      $region70: #{tpu_custom_call.1} parent=5 // pred_check_branch
        %449 = sbr.rel (%p446) target = $region72
      $region71: #{tpu_custom_call.1} parent=5 // pred_region
        %s450 = ssub.s32 %s23, 1
        %s451 = sand.u32 %s99, 1
        %s452 = scalar_lea.sflag [#allocation4], %s451
        %s453 = sand.u32 %s99, 1
        %s454 = smul.addr %s453, 64
        %s455 = scalar_lea.vmem [#allocation3], %s454
        // Predicated region
        $region73: #{tpu_custom_call.1} parent=71 // pred_check
          %p456 = pneg %p112
        $region74: #{tpu_custom_call.1} parent=71 // pred_check_branch
          %458 = sbr.rel (%p456) target = $region76
        $region75: #{tpu_custom_call.1} parent=71 // pred_region
          %459 = dma.done %s452, 1024
        $region76: #{tpu_custom_call.1} parent=71 // pred_fallthru
          _
        %p460 = pneg %p44
        %p461 = pneg %p41
        %p462 = pneg %p65
        %p463 = pneg %p62
        %p464 = pneg %p86
        %p465 = pneg %p83
        %s466 = sand.u32 %s99, 1
        %s467 = scalar_lea.sflag [#allocation4], %s466
        %s468 = sand.u32 %s99, 1
        %s469 = smul.addr %s468, 64
        %s470 = scalar_lea.vmem [#allocation3], %s469
        %p471 = pneg %p112
        %p472 = pneg %p109
        %p473 = scmp.lt.s32.totalorder %s28, 1
        %s474 = scalar_select %p473, %s28, 1
        %s475 = smul.addr %s474, 4
        %s476 = scalar_lea.vmem %s4, %s475
        %p477 = pneg %p138
        %p478 = pneg %p135
        %p479 = scmp.lt.s32.totalorder %s28, 1
        %s480 = scalar_select %p479, %s28, 1
        %s481 = smul.addr %s480, 4
        %s482 = smul.addr %s481, 4
        %s483 = scalar_lea.vmem %s5, %s482
        %p484 = pneg %p164
        %p485 = pneg %p161
        %p486 = scmp.lt.s32.totalorder %s28, 1
        %s487 = scalar_select %p486, %s28, 1
        %s488 = scalar_lea.vmem %s6, %s487
        %p489 = pneg %p190
        %p490 = pneg %p187
        %p491 = scmp.lt.s32.totalorder %s28, 1
        %s492 = scalar_select %p491, %s28, 1
        %s493 = smul.addr %s492, 8
        %s494 = smul.addr %s493, 4
        %s495 = scalar_lea.vmem %s7, %s494
        %p496 = pneg %p216
        %p497 = pneg %p213
        %p498 = scmp.lt.s32.totalorder %s28, 1
        %s499 = scalar_select %p498, %s28, 1
        %s500 = smul.addr %s499, 5
        %s501 = scalar_lea.vmem %s8, %s500
        %p502 = pneg %p242
        %p503 = pneg %p239
        %p504 = pneg %p263
        %p505 = pneg %p260
        %p506 = pneg %p284
        %p507 = pneg %p281
        %p508 = pneg %p305
        %p509 = pneg %p302
        %p510 = pneg %p326
        %p511 = pneg %p323
        %p512 = pneg %p347
        %p513 = pneg %p344
        %p514 = scmp.lt.s32.totalorder %s28, 1
        %s515 = scalar_select %p514, %s28, 1
        %s516 = smul.addr %s515, 4
        %s517 = scalar_lea.vmem %s4, %s516
        %p518 = scmp.lt.s32.totalorder %s28, 1
        %s519 = scalar_select %p518, %s28, 1
        %s520 = smul.addr %s519, 4
        %s521 = smul.addr %s520, 4
        %s522 = scalar_lea.vmem %s5, %s521
        %p523 = scmp.lt.s32.totalorder %s28, 1
        %s524 = scalar_select %p523, %s28, 1
        %s525 = scalar_lea.vmem %s6, %s524
        %p526 = scmp.lt.s32.totalorder %s28, 1
        %s527 = scalar_select %p526, %s28, 1
        %s528 = smul.addr %s527, 8
        %s529 = smul.addr %s528, 4
        %s530 = scalar_lea.vmem %s7, %s529
        %p531 = scmp.lt.s32.totalorder %s28, 1
        %s532 = scalar_select %p531, %s28, 1
        %s533 = smul.addr %s532, 5
        %s534 = scalar_lea.vmem %s8, %s533
        %p536 = scmp.eq.s32.totalorder %s28, 0
        // Predicated region
        $region77: #{tpu_custom_call.1} parent=71 // pred_check
          %p537 = pneg %p536
        $region78: #{tpu_custom_call.1} parent=71 // pred_check_branch
          %539 = sbr.rel (%p537) target = $region80
        $region79: #{tpu_custom_call.1} parent=71 // pred_region
          %v540 = vld [vmem:[%s0] sm:$0xff]
          %v541 = vld [vmem:[%s0 + $0x8] sm:$0xff]
          %v542 = vld [vmem:[%s2] sm:$0x1]
          %s543 = scalar_lea.vmem %s2, 1
          %v544 = vld [vmem:[%s543] sm:$0x1]
          %vm545 = vcmask 261120
          %v546 = vsel %vm545, %v540, 0.0
          %547 = vadd.xlane.f32.xlu0 %v546
          %v548 = vpop.xlane.xlu0 %547
          %v549 = vsel %vm545, %v541, 0.0
          %550 = vadd.xlane.f32.xlu0 %v549
          %v551 = vpop.xlane.xlu0 %550
          %v552 = vrcp.pop 32.0
          %v553 = vmul.f32 %v548, %v552
          %v554 = vmul.f32 %v551, %v552
          %v555 = vsub.f32 %v540, %v553
          %v556 = vsub.f32 %v541, %v554
          %v557 = vmul.f32 %v555, %v555
          %v558 = vmul.f32 %v556, %v556
          %v559 = vsel %vm545, %v557, 0.0
          %560 = vadd.xlane.f32.xlu0 %v559
          %v561 = vpop.xlane.xlu0 %560
          %v562 = vsel %vm545, %v558, 0.0
          %563 = vadd.xlane.f32.xlu0 %v562
          %v564 = vpop.xlane.xlu0 %563
          %v565 = vmul.f32 %v561, %v552
          %v566 = vmul.f32 %v564, %v552
          %v567 = vadd.f32 %v565, 1e-12
          %v568 = vadd.f32 %v566, 1e-12
          %v569 = vrsqrt.pop %v567
          %v570 = vrsqrt.pop %v568
          %v571 = vmul.f32 %v555, %v569
          %v572 = vmul.f32 %v556, %v570
          %v574 = vlaneseq
          %v575 = vshrl.u32 %v574, 7
          %v576 = vsub.s32 0, %v575
          %v577 = vrot.slane %v542, %v576
          %v579 = vmul.f32 %v577, %v571
          %v580 = vmul.f32 %v577, %v572
          %v582 = vlaneseq
          %v583 = vshrl.u32 %v582, 7
          %v584 = vsub.s32 0, %v583
          %v585 = vrot.slane %v544, %v584
          %v587 = vadd.f32 %v579, %v585
          %v588 = vadd.f32 %v580, %v585
          %589 = vst.msk [vmem:[#allocation2] sm:$0xff] %vm545, %v587
          %590 = vst.msk [vmem:[#allocation2 + $0x8] sm:$0xff] %vm545, %v588
        $region80: #{tpu_custom_call.1} parent=71 // pred_fallthru
          _
        %v591 = vld [vmem:[#allocation2] sm:$0xff]
        %v592 = vld [vmem:[#allocation2 + $0x8] sm:$0xff]
        %v593 = vld [vmem:[%s1] sm:$0xff]
        %v594 = vld [vmem:[%s1 + $0x8] sm:$0xff]
        %v595 = vld [vmem:[%s455] sm:$0xf]
        %v596 = vld [vmem:[%s455 + $0x4] sm:$0xf]
        %v597 = vld [vmem:[%s455 + $0x8] sm:$0xf]
        %v598 = vld [vmem:[%s455 + $0xc] sm:$0xf]
        %v599 = vpack.c.bf16 %v592, %v591
        %v600 = vld [vmem:[%s517] sm:$0x1]
        %v602 = vlaneseq
        %v603 = vshrl.u32 %v602, 7
        %v604 = vsub.s32 0, %v603
        %v605 = vrot.slane %v600, %v604
        %v611 = vunpack.c.l.b16 %v595
        %v612 = vunpack.c.l.b16 %v596
        %v613 = vunpack.c.l.b16 %v597
        %v614 = vunpack.c.l.b16 %v598
        %v615 = vpack.c.b16 %v612, %v611
        %v616 = vpack.c.b16 %v614, %v613
        %vm619 = vcmask 261120
        %v621 = vsel %vm619, %v599, 0
        %623 = vmatprep.subr.bf16.mxu0 0
        %624 = vmatpush1.bf16.msra.mxu0 0
        %625 = vmatprep.subr.bf16.mxu0 0
        %626 = vmatpush1.bf16.msra.mxu0 0
        %627 = vmatprep.subr.bf16.mxu0 0
        %628 = vmatpush1.bf16.msra.mxu0 0
        %629 = vmatprep.subr.bf16.mxu0 0
        %630 = vmatpush1.bf16.msra.mxu0 0
        %631 = vmatprep.subr.bf16.mxu0 0
        %632 = vmatpush1.bf16.msra.mxu0 0
        %633 = vmatprep.subr.bf16.mxu0 0
        %634 = vmatpush1.bf16.msra.mxu0 0
        %635 = vmatprep.subr.bf16.mxu0 0
        %636 = vmatpush1.bf16.msra.mxu0 %v616
        %637 = vmatprep.subr.bf16.mxu0 0
        %638 = vmatpush1.bf16.msra.mxu0 %v615
        %639 = vmatprep.subr.bf16.mxu0 0
        %640 = vmatpush2.bf16.msra.mxu0 0
        %641 = vmatprep.subr.bf16.mxu0 0
        %642 = vmatpush2.bf16.msra.mxu0 0
        %643 = vmatprep.subr.bf16.mxu0 0
        %644 = vmatpush2.bf16.msra.mxu0 0
        %645 = vmatprep.subr.bf16.mxu0 0
        %646 = vmatpush2.bf16.msra.mxu0 0
        %647 = vmatprep.subr.bf16.mxu0 0
        %648 = vmatpush2.bf16.msra.mxu0 0
        %649 = vmatprep.subr.bf16.mxu0 0
        %650 = vmatpush2.bf16.msra.mxu0 0
        %651 = vmatprep.subr.bf16.mxu0 0
        %652 = vmatpush2.bf16.msra.mxu0 0
        %653 = vmatprep.subr.bf16.mxu0 0
        %654 = vmatpush2.bf16.msra.mxu0 0
        %655 = vmatprep.mubr.bf16.mxu0 0
        %656 = vmatmul.mubr.bf16.gmra.mxu0 %v621
        %v657 = vpop.f32.mrf.mxu0
        %v658 = vadd.f32 %v605, %v657
        %v659 = vpop.f32.mrf.mxu0
        %v660 = vpop.f32.mrf.mxu0
        %v661 = vadd.f32 %v605, %v660
        %v662 = vpop.f32.mrf.mxu0
        %663 = vdwg.mxu0
        %s664 = scalar_lea.vmem %s455, 16 [#allocation3]
        %v665 = vld [vmem:[%s664] sm:$0xf]
        %v666 = vld [vmem:[%s664 + $0x4] sm:$0xf]
        %v667 = vld [vmem:[%s664 + $0x8] sm:$0xf]
        %v668 = vld [vmem:[%s664 + $0xc] sm:$0xf]
        %s669 = scalar_lea.vmem %s517, 1
        %v670 = vld [vmem:[%s669] sm:$0x1]
        %v672 = vlaneseq
        %v673 = vshrl.u32 %v672, 7
        %v674 = vsub.s32 0, %v673
        %v675 = vrot.slane %v670, %v674
        %v681 = vunpack.c.l.b16 %v665
        %v682 = vunpack.c.l.b16 %v666
        %v683 = vunpack.c.l.b16 %v667
        %v684 = vunpack.c.l.b16 %v668
        %v685 = vpack.c.b16 %v682, %v681
        %v686 = vpack.c.b16 %v684, %v683
        %689 = vmatprep.subr.bf16.mxu0 0
        %690 = vmatpush1.bf16.msra.mxu0 0
        %691 = vmatprep.subr.bf16.mxu0 0
        %692 = vmatpush1.bf16.msra.mxu0 0
        %693 = vmatprep.subr.bf16.mxu0 0
        %694 = vmatpush1.bf16.msra.mxu0 0
        %695 = vmatprep.subr.bf16.mxu0 0
        %696 = vmatpush1.bf16.msra.mxu0 0
        %697 = vmatprep.subr.bf16.mxu0 0
        %698 = vmatpush1.bf16.msra.mxu0 0
        %699 = vmatprep.subr.bf16.mxu0 0
        %700 = vmatpush1.bf16.msra.mxu0 0
        %701 = vmatprep.subr.bf16.mxu0 0
        %702 = vmatpush1.bf16.msra.mxu0 %v686
        %703 = vmatprep.subr.bf16.mxu0 0
        %704 = vmatpush1.bf16.msra.mxu0 %v685
        %705 = vmatprep.subr.bf16.mxu0 0
        %706 = vmatpush2.bf16.msra.mxu0 0
        %707 = vmatprep.subr.bf16.mxu0 0
        %708 = vmatpush2.bf16.msra.mxu0 0
        %709 = vmatprep.subr.bf16.mxu0 0
        %710 = vmatpush2.bf16.msra.mxu0 0
        %711 = vmatprep.subr.bf16.mxu0 0
        %712 = vmatpush2.bf16.msra.mxu0 0
        %713 = vmatprep.subr.bf16.mxu0 0
        %714 = vmatpush2.bf16.msra.mxu0 0
        %715 = vmatprep.subr.bf16.mxu0 0
        %716 = vmatpush2.bf16.msra.mxu0 0
        %717 = vmatprep.subr.bf16.mxu0 0
        %718 = vmatpush2.bf16.msra.mxu0 0
        %719 = vmatprep.subr.bf16.mxu0 0
        %720 = vmatpush2.bf16.msra.mxu0 0
        %721 = vmatprep.mubr.bf16.mxu0 0
        %722 = vmatmul.mubr.bf16.gmra.mxu0 %v621
        %v723 = vpop.f32.mrf.mxu0
        %v724 = vadd.f32 %v675, %v723
        %v725 = vpop.f32.mrf.mxu0
        %v726 = vpop.f32.mrf.mxu0
        %v727 = vadd.f32 %v675, %v726
        %v728 = vpop.f32.mrf.mxu0
        %729 = vdwg.mxu0
        %s730 = scalar_lea.vmem %s455, 32 [#allocation3]
        %v731 = vld [vmem:[%s730] sm:$0xf]
        %v732 = vld [vmem:[%s730 + $0x4] sm:$0xf]
        %v733 = vld [vmem:[%s730 + $0x8] sm:$0xf]
        %v734 = vld [vmem:[%s730 + $0xc] sm:$0xf]
        %s735 = scalar_lea.vmem %s517, 2
        %v736 = vld [vmem:[%s735] sm:$0x1]
        %v738 = vlaneseq
        %v739 = vshrl.u32 %v738, 7
        %v740 = vsub.s32 0, %v739
        %v741 = vrot.slane %v736, %v740
        %v747 = vunpack.c.l.b16 %v731
        %v748 = vunpack.c.l.b16 %v732
        %v749 = vunpack.c.l.b16 %v733
        %v750 = vunpack.c.l.b16 %v734
        %v751 = vpack.c.b16 %v748, %v747
        %v752 = vpack.c.b16 %v750, %v749
        %755 = vmatprep.subr.bf16.mxu0 0
        %756 = vmatpush1.bf16.msra.mxu0 0
        %757 = vmatprep.subr.bf16.mxu0 0
        %758 = vmatpush1.bf16.msra.mxu0 0
        %759 = vmatprep.subr.bf16.mxu0 0
        %760 = vmatpush1.bf16.msra.mxu0 0
        %761 = vmatprep.subr.bf16.mxu0 0
        %762 = vmatpush1.bf16.msra.mxu0 0
        %763 = vmatprep.subr.bf16.mxu0 0
        %764 = vmatpush1.bf16.msra.mxu0 0
        %765 = vmatprep.subr.bf16.mxu0 0
        %766 = vmatpush1.bf16.msra.mxu0 0
        %767 = vmatprep.subr.bf16.mxu0 0
        %768 = vmatpush1.bf16.msra.mxu0 %v752
        %769 = vmatprep.subr.bf16.mxu0 0
        %770 = vmatpush1.bf16.msra.mxu0 %v751
        %771 = vmatprep.subr.bf16.mxu0 0
        %772 = vmatpush2.bf16.msra.mxu0 0
        %773 = vmatprep.subr.bf16.mxu0 0
        %774 = vmatpush2.bf16.msra.mxu0 0
        %775 = vmatprep.subr.bf16.mxu0 0
        %776 = vmatpush2.bf16.msra.mxu0 0
        %777 = vmatprep.subr.bf16.mxu0 0
        %778 = vmatpush2.bf16.msra.mxu0 0
        %779 = vmatprep.subr.bf16.mxu0 0
        %780 = vmatpush2.bf16.msra.mxu0 0
        %781 = vmatprep.subr.bf16.mxu0 0
        %782 = vmatpush2.bf16.msra.mxu0 0
        %783 = vmatprep.subr.bf16.mxu0 0
        %784 = vmatpush2.bf16.msra.mxu0 0
        %785 = vmatprep.subr.bf16.mxu0 0
        %786 = vmatpush2.bf16.msra.mxu0 0
        %787 = vmatprep.mubr.bf16.mxu0 0
        %788 = vmatmul.mubr.bf16.gmra.mxu0 %v621
        %v789 = vpop.f32.mrf.mxu0
        %v790 = vadd.f32 %v741, %v789
        %v791 = vpop.f32.mrf.mxu0
        %v792 = vpop.f32.mrf.mxu0
        %v793 = vadd.f32 %v741, %v792
        %v794 = vpop.f32.mrf.mxu0
        %795 = vdwg.mxu0
        %v796 = vlaneseq
        %v797 = vand.u32 %v796, 127
        %v798 = vpack.c.bf16 %v727, %v724
        %vm799 = vcmp.ge.s32.totalorder %v797, 0
        %vm800 = vcmp.lt.s32.totalorder %v797, 8
        %vm801 = vmand %vm799, %vm800
        %v802 = vsel %vm801, 1.0, 0.0
        %v803 = vmul.f32 %v658, %v802
        %v804 = vmul.f32 %v661, %v802
        %v805 = vpack.c.bf16 %v804, %v803
        %v807 = vsel %vm619, %v805, 0
        %v810 = vsel %vm619, %v798, 0
        %812 = vmatprep.subr.bf16.mxu0 0
        %813 = vmatpush1.bf16.xpose.msra.mxu0 0
        %814 = vmatprep.subr.bf16.mxu0 0
        %815 = vmatpush1.bf16.xpose.msra.mxu0 0
        %816 = vmatprep.subr.bf16.mxu0 0
        %817 = vmatpush1.bf16.xpose.msra.mxu0 0
        %818 = vmatprep.subr.bf16.mxu0 0
        %819 = vmatpush1.bf16.xpose.msra.mxu0 0
        %820 = vmatprep.subr.bf16.mxu0 0
        %821 = vmatpush1.bf16.xpose.msra.mxu0 0
        %822 = vmatprep.subr.bf16.mxu0 0
        %823 = vmatpush1.bf16.xpose.msra.mxu0 0
        %824 = vmatprep.subr.bf16.mxu0 0
        %825 = vmatpush1.bf16.xpose.msra.mxu0 0
        %826 = vmatprep.subr.bf16.mxu0 0
        %827 = vmatpush1.bf16.xpose.msra.mxu0 %v810
        %828 = vmatprep.subr.bf16.mxu0 0
        %829 = vmatpush2.bf16.xpose.msra.mxu0 0
        %830 = vmatprep.subr.bf16.mxu0 0
        %831 = vmatpush2.bf16.xpose.msra.mxu0 0
        %832 = vmatprep.subr.bf16.mxu0 0
        %833 = vmatpush2.bf16.xpose.msra.mxu0 0
        %834 = vmatprep.subr.bf16.mxu0 0
        %835 = vmatpush2.bf16.xpose.msra.mxu0 0
        %836 = vmatprep.subr.bf16.mxu0 0
        %837 = vmatpush2.bf16.xpose.msra.mxu0 0
        %838 = vmatprep.subr.bf16.mxu0 0
        %839 = vmatpush2.bf16.xpose.msra.mxu0 0
        %840 = vmatprep.subr.bf16.mxu0 0
        %841 = vmatpush2.bf16.xpose.msra.mxu0 0
        %842 = vmatprep.subr.bf16.mxu0 0
        %843 = vmatpush2.bf16.xpose.msra.mxu0 0
        %844 = vmatprep.mubr.bf16.mxu0 0
        %845 = vmatmul.mubr.bf16.gmra.mxu0 %v807
        %v846 = vpop.f32.mrf.mxu0
        %v847 = vadd.f32 0.0, %v846
        %v848 = vpop.f32.mrf.mxu0
        %v849 = vpop.f32.mrf.mxu0
        %v850 = vadd.f32 0.0, %v849
        %v851 = vpop.f32.mrf.mxu0
        %852 = vdwg.mxu0
        %v853 = vmul.f32 %v847, 0.35355338
        %v854 = vmul.f32 %v850, 0.35355338
        %v855 = vadd.f32 %v853, %v593
        %v856 = vadd.f32 %v854, %v594
        %vm857 = vcmask 130048
        %v858 = vsel %vm857, %v855, -inf
        %859 = vmax.xlane.f32.xlu0 %v858
        %v860 = vpop.xlane.xlu0 %859
        %v861 = vsel %vm857, %v856, -inf
        %862 = vmax.xlane.f32.xlu0 %v861
        %v863 = vpop.xlane.xlu0 %862
        %v864 = vsub.f32 %v855, %v860
        %v865 = vsub.f32 %v856, %v863
        %v866 = vmul.f32 %v864, 1.442695
        %v867 = vpow.pop %v866
        %v868 = vmul.f32 %v865, 1.442695
        %v869 = vpow.pop %v868
        %v870 = vsel %vm857, %v867, 0.0
        %871 = vadd.xlane.f32.xlu0 %v870
        %v872 = vpop.xlane.xlu0 %871
        %v873 = vsel %vm857, %v869, 0.0
        %874 = vadd.xlane.f32.xlu0 %v873
        %v875 = vpop.xlane.xlu0 %874
        %v876 = vrcp.pop %v872
        %v877 = vmul.f32 %v867, %v876
        %v878 = vrcp.pop %v875
        %v879 = vmul.f32 %v869, %v878
        %v880 = vpack.c.bf16 %v879, %v877
        %v881 = vmul.f32 %v790, %v802
        %v882 = vmul.f32 %v793, %v802
        %v883 = vpack.c.bf16 %v882, %v881
        %vm884 = vcmp.ge.s32.totalorder %v797, 8
        %vm885 = vcmp.lt.s32.totalorder %v797, 16
        %vm886 = vmand %vm884, %vm885
        %v887 = vsel %vm886, 1.0, 0.0
        %v888 = vmul.f32 %v658, %v887
        %v889 = vmul.f32 %v661, %v887
        %v890 = vpack.c.bf16 %v889, %v888
        %v892 = vsel %vm619, %v890, 0
        %894 = vmatprep.subr.bf16.mxu0 0
        %895 = vmatpush1.bf16.xpose.msra.mxu0 0
        %896 = vmatprep.subr.bf16.mxu0 0
        %897 = vmatpush1.bf16.xpose.msra.mxu0 0
        %898 = vmatprep.subr.bf16.mxu0 0
        %899 = vmatpush1.bf16.xpose.msra.mxu0 0
        %900 = vmatprep.subr.bf16.mxu0 0
        %901 = vmatpush1.bf16.xpose.msra.mxu0 0
        %902 = vmatprep.subr.bf16.mxu0 0
        %903 = vmatpush1.bf16.xpose.msra.mxu0 0
        %904 = vmatprep.subr.bf16.mxu0 0
        %905 = vmatpush1.bf16.xpose.msra.mxu0 0
        %906 = vmatprep.subr.bf16.mxu0 0
        %907 = vmatpush1.bf16.xpose.msra.mxu0 0
        %908 = vmatprep.subr.bf16.mxu0 0
        %909 = vmatpush1.bf16.xpose.msra.mxu0 %v810
        %910 = vmatprep.subr.bf16.mxu0 0
        %911 = vmatpush2.bf16.xpose.msra.mxu0 0
        %912 = vmatprep.subr.bf16.mxu0 0
        %913 = vmatpush2.bf16.xpose.msra.mxu0 0
        %914 = vmatprep.subr.bf16.mxu0 0
        %915 = vmatpush2.bf16.xpose.msra.mxu0 0
        %916 = vmatprep.subr.bf16.mxu0 0
        %917 = vmatpush2.bf16.xpose.msra.mxu0 0
        %918 = vmatprep.subr.bf16.mxu0 0
        %919 = vmatpush2.bf16.xpose.msra.mxu0 0
        %920 = vmatprep.subr.bf16.mxu0 0
        %921 = vmatpush2.bf16.xpose.msra.mxu0 0
        %922 = vmatprep.subr.bf16.mxu0 0
        %923 = vmatpush2.bf16.xpose.msra.mxu0 0
        %924 = vmatprep.subr.bf16.mxu0 0
        %925 = vmatpush2.bf16.xpose.msra.mxu0 0
        %926 = vmatprep.mubr.bf16.mxu0 0
        %927 = vmatmul.mubr.bf16.gmra.mxu0 %v892
        %v928 = vpop.f32.mrf.mxu0
        %v929 = vadd.f32 0.0, %v928
        %v930 = vpop.f32.mrf.mxu0
        %v931 = vpop.f32.mrf.mxu0
        %v932 = vadd.f32 0.0, %v931
        %v933 = vpop.f32.mrf.mxu0
        %934 = vdwg.mxu0
        %v935 = vmul.f32 %v929, 0.35355338
        %v936 = vmul.f32 %v932, 0.35355338
        %v937 = vadd.f32 %v935, %v593
        %v938 = vadd.f32 %v936, %v594
        %v939 = vsel %vm857, %v937, -inf
        %940 = vmax.xlane.f32.xlu0 %v939
        %v941 = vpop.xlane.xlu0 %940
        %v942 = vsel %vm857, %v938, -inf
        %943 = vmax.xlane.f32.xlu0 %v942
        %v944 = vpop.xlane.xlu0 %943
        %v945 = vsub.f32 %v937, %v941
        %v946 = vsub.f32 %v938, %v944
        %v947 = vmul.f32 %v945, 1.442695
        %v948 = vpow.pop %v947
        %v949 = vmul.f32 %v946, 1.442695
        %v950 = vpow.pop %v949
        %v951 = vsel %vm857, %v948, 0.0
        %952 = vadd.xlane.f32.xlu0 %v951
        %v953 = vpop.xlane.xlu0 %952
        %v954 = vsel %vm857, %v950, 0.0
        %955 = vadd.xlane.f32.xlu0 %v954
        %v956 = vpop.xlane.xlu0 %955
        %v957 = vrcp.pop %v953
        %v958 = vmul.f32 %v948, %v957
        %v959 = vrcp.pop %v956
        %v960 = vmul.f32 %v950, %v959
        %v961 = vpack.c.bf16 %v960, %v958
        %v962 = vmul.f32 %v790, %v887
        %v963 = vmul.f32 %v793, %v887
        %v964 = vpack.c.bf16 %v963, %v962
        %v966 = vsel %vm857, %v961, 0
        %968 = vmatprep.subr.bf16.mxu0 0
        %969 = vmatpush1.bf16.msra.mxu0 0
        %970 = vmatprep.subr.bf16.mxu0 0
        %971 = vmatpush1.bf16.msra.mxu0 0
        %972 = vmatprep.subr.bf16.mxu0 0
        %973 = vmatpush1.bf16.msra.mxu0 0
        %974 = vmatprep.subr.bf16.mxu0 0
        %975 = vmatpush1.bf16.msra.mxu0 0
        %976 = vmatprep.subr.bf16.mxu0 0
        %977 = vmatpush1.bf16.msra.mxu0 0
        %978 = vmatprep.subr.bf16.mxu0 0
        %979 = vmatpush1.bf16.msra.mxu0 0
        %980 = vmatprep.subr.bf16.mxu0 0
        %981 = vmatpush1.bf16.msra.mxu0 0
        %982 = vmatprep.subr.bf16.mxu0 0
        %983 = vmatpush1.bf16.msra.mxu0 %v964
        %984 = vmatprep.subr.bf16.mxu0 0
        %985 = vmatpush2.bf16.msra.mxu0 0
        %986 = vmatprep.subr.bf16.mxu0 0
        %987 = vmatpush2.bf16.msra.mxu0 0
        %988 = vmatprep.subr.bf16.mxu0 0
        %989 = vmatpush2.bf16.msra.mxu0 0
        %990 = vmatprep.subr.bf16.mxu0 0
        %991 = vmatpush2.bf16.msra.mxu0 0
        %992 = vmatprep.subr.bf16.mxu0 0
        %993 = vmatpush2.bf16.msra.mxu0 0
        %994 = vmatprep.subr.bf16.mxu0 0
        %995 = vmatpush2.bf16.msra.mxu0 0
        %996 = vmatprep.subr.bf16.mxu0 0
        %997 = vmatpush2.bf16.msra.mxu0 0
        %998 = vmatprep.subr.bf16.mxu0 0
        %999 = vmatpush2.bf16.msra.mxu0 0
        %1000 = vmatprep.mubr.bf16.mxu0 0
        %1001 = vmatmul.mubr.bf16.gmra.mxu0 %v966
        %v1002 = vpop.f32.mrf.mxu0
        %v1003 = vadd.f32 0.0, %v1002
        %v1004 = vpop.f32.mrf.mxu0
        %v1005 = vpop.f32.mrf.mxu0
        %v1006 = vadd.f32 0.0, %v1005
        %v1007 = vpop.f32.mrf.mxu0
        %1008 = vdwg.mxu0
        %v1010 = vsel %vm857, %v880, 0
        %1012 = vmatprep.subr.bf16.mxu0 0
        %1013 = vmatpush1.bf16.msra.mxu0 0
        %1014 = vmatprep.subr.bf16.mxu0 0
        %1015 = vmatpush1.bf16.msra.mxu0 0
        %1016 = vmatprep.subr.bf16.mxu0 0
        %1017 = vmatpush1.bf16.msra.mxu0 0
        %1018 = vmatprep.subr.bf16.mxu0 0
        %1019 = vmatpush1.bf16.msra.mxu0 0
        %1020 = vmatprep.subr.bf16.mxu0 0
        %1021 = vmatpush1.bf16.msra.mxu0 0
        %1022 = vmatprep.subr.bf16.mxu0 0
        %1023 = vmatpush1.bf16.msra.mxu0 0
        %1024 = vmatprep.subr.bf16.mxu0 0
        %1025 = vmatpush1.bf16.msra.mxu0 0
        %1026 = vmatprep.subr.bf16.mxu0 0
        %1027 = vmatpush1.bf16.msra.mxu0 %v883
        %1028 = vmatprep.subr.bf16.mxu0 0
        %1029 = vmatpush2.bf16.msra.mxu0 0
        %1030 = vmatprep.subr.bf16.mxu0 0
        %1031 = vmatpush2.bf16.msra.mxu0 0
        %1032 = vmatprep.subr.bf16.mxu0 0
        %1033 = vmatpush2.bf16.msra.mxu0 0
        %1034 = vmatprep.subr.bf16.mxu0 0
        %1035 = vmatpush2.bf16.msra.mxu0 0
        %1036 = vmatprep.subr.bf16.mxu0 0
        %1037 = vmatpush2.bf16.msra.mxu0 0
        %1038 = vmatprep.subr.bf16.mxu0 0
        %1039 = vmatpush2.bf16.msra.mxu0 0
        %1040 = vmatprep.subr.bf16.mxu0 0
        %1041 = vmatpush2.bf16.msra.mxu0 0
        %1042 = vmatprep.subr.bf16.mxu0 0
        %1043 = vmatpush2.bf16.msra.mxu0 0
        %1044 = vmatprep.mubr.bf16.mxu0 0
        %1045 = vmatmul.mubr.bf16.gmra.mxu0 %v1010
        %v1046 = vpop.f32.mrf.mxu0
        %v1047 = vadd.f32 %v1003, %v1046
        %v1048 = vpop.f32.mrf.mxu0
        %v1049 = vpop.f32.mrf.mxu0
        %v1050 = vadd.f32 %v1006, %v1049
        %v1051 = vpop.f32.mrf.mxu0
        %1052 = vdwg.mxu0
        %vm1053 = vcmp.ge.s32.totalorder %v797, 16
        %vm1054 = vcmp.lt.s32.totalorder %v797, 24
        %vm1055 = vmand %vm1053, %vm1054
        %v1056 = vsel %vm1055, 1.0, 0.0
        %v1057 = vmul.f32 %v658, %v1056
        %v1058 = vmul.f32 %v661, %v1056
        %v1059 = vpack.c.bf16 %v1058, %v1057
        %v1061 = vsel %vm619, %v1059, 0
        %1063 = vmatprep.subr.bf16.mxu0 0
        %1064 = vmatpush1.bf16.xpose.msra.mxu0 0
        %1065 = vmatprep.subr.bf16.mxu0 0
        %1066 = vmatpush1.bf16.xpose.msra.mxu0 0
        %1067 = vmatprep.subr.bf16.mxu0 0
        %1068 = vmatpush1.bf16.xpose.msra.mxu0 0
        %1069 = vmatprep.subr.bf16.mxu0 0
        %1070 = vmatpush1.bf16.xpose.msra.mxu0 0
        %1071 = vmatprep.subr.bf16.mxu0 0
        %1072 = vmatpush1.bf16.xpose.msra.mxu0 0
        %1073 = vmatprep.subr.bf16.mxu0 0
        %1074 = vmatpush1.bf16.xpose.msra.mxu0 0
        %1075 = vmatprep.subr.bf16.mxu0 0
        %1076 = vmatpush1.bf16.xpose.msra.mxu0 0
        %1077 = vmatprep.subr.bf16.mxu0 0
        %1078 = vmatpush1.bf16.xpose.msra.mxu0 %v810
        %1079 = vmatprep.subr.bf16.mxu0 0
        %1080 = vmatpush2.bf16.xpose.msra.mxu0 0
        %1081 = vmatprep.subr.bf16.mxu0 0
        %1082 = vmatpush2.bf16.xpose.msra.mxu0 0
        %1083 = vmatprep.subr.bf16.mxu0 0
        %1084 = vmatpush2.bf16.xpose.msra.mxu0 0
        %1085 = vmatprep.subr.bf16.mxu0 0
        %1086 = vmatpush2.bf16.xpose.msra.mxu0 0
        %1087 = vmatprep.subr.bf16.mxu0 0
        %1088 = vmatpush2.bf16.xpose.msra.mxu0 0
        %1089 = vmatprep.subr.bf16.mxu0 0
        %1090 = vmatpush2.bf16.xpose.msra.mxu0 0
        %1091 = vmatprep.subr.bf16.mxu0 0
        %1092 = vmatpush2.bf16.xpose.msra.mxu0 0
        %1093 = vmatprep.subr.bf16.mxu0 0
        %1094 = vmatpush2.bf16.xpose.msra.mxu0 0
        %1095 = vmatprep.mubr.bf16.mxu0 0
        %1096 = vmatmul.mubr.bf16.gmra.mxu0 %v1061
        %v1097 = vpop.f32.mrf.mxu0
        %v1098 = vadd.f32 0.0, %v1097
        %v1099 = vpop.f32.mrf.mxu0
        %v1100 = vpop.f32.mrf.mxu0
        %v1101 = vadd.f32 0.0, %v1100
        %v1102 = vpop.f32.mrf.mxu0
        %1103 = vdwg.mxu0
        %v1104 = vmul.f32 %v1098, 0.35355338
        %v1105 = vmul.f32 %v1101, 0.35355338
        %v1106 = vadd.f32 %v1104, %v593
        %v1107 = vadd.f32 %v1105, %v594
        %v1108 = vsel %vm857, %v1106, -inf
        %1109 = vmax.xlane.f32.xlu0 %v1108
        %v1110 = vpop.xlane.xlu0 %1109
        %v1111 = vsel %vm857, %v1107, -inf
        %1112 = vmax.xlane.f32.xlu0 %v1111
        %v1113 = vpop.xlane.xlu0 %1112
        %v1114 = vsub.f32 %v1106, %v1110
        %v1115 = vsub.f32 %v1107, %v1113
        %v1116 = vmul.f32 %v1114, 1.442695
        %v1117 = vpow.pop %v1116
        %v1118 = vmul.f32 %v1115, 1.442695
        %v1119 = vpow.pop %v1118
        %v1120 = vsel %vm857, %v1117, 0.0
        %1121 = vadd.xlane.f32.xlu0 %v1120
        %v1122 = vpop.xlane.xlu0 %1121
        %v1123 = vsel %vm857, %v1119, 0.0
        %1124 = vadd.xlane.f32.xlu0 %v1123
        %v1125 = vpop.xlane.xlu0 %1124
        %v1126 = vrcp.pop %v1122
        %v1127 = vmul.f32 %v1117, %v1126
        %v1128 = vrcp.pop %v1125
        %v1129 = vmul.f32 %v1119, %v1128
        %v1130 = vpack.c.bf16 %v1129, %v1127
        %v1131 = vmul.f32 %v790, %v1056
        %v1132 = vmul.f32 %v793, %v1056
        %v1133 = vpack.c.bf16 %v1132, %v1131
        %v1135 = vsel %vm857, %v1130, 0
        %1137 = vmatprep.subr.bf16.mxu0 0
        %1138 = vmatpush1.bf16.msra.mxu0 0
        %1139 = vmatprep.subr.bf16.mxu0 0
        %1140 = vmatpush1.bf16.msra.mxu0 0
        %1141 = vmatprep.subr.bf16.mxu0 0
        %1142 = vmatpush1.bf16.msra.mxu0 0
        %1143 = vmatprep.subr.bf16.mxu0 0
        %1144 = vmatpush1.bf16.msra.mxu0 0
        %1145 = vmatprep.subr.bf16.mxu0 0
        %1146 = vmatpush1.bf16.msra.mxu0 0
        %1147 = vmatprep.subr.bf16.mxu0 0
        %1148 = vmatpush1.bf16.msra.mxu0 0
        %1149 = vmatprep.subr.bf16.mxu0 0
        %1150 = vmatpush1.bf16.msra.mxu0 0
        %1151 = vmatprep.subr.bf16.mxu0 0
        %1152 = vmatpush1.bf16.msra.mxu0 %v1133
        %1153 = vmatprep.subr.bf16.mxu0 0
        %1154 = vmatpush2.bf16.msra.mxu0 0
        %1155 = vmatprep.subr.bf16.mxu0 0
        %1156 = vmatpush2.bf16.msra.mxu0 0
        %1157 = vmatprep.subr.bf16.mxu0 0
        %1158 = vmatpush2.bf16.msra.mxu0 0
        %1159 = vmatprep.subr.bf16.mxu0 0
        %1160 = vmatpush2.bf16.msra.mxu0 0
        %1161 = vmatprep.subr.bf16.mxu0 0
        %1162 = vmatpush2.bf16.msra.mxu0 0
        %1163 = vmatprep.subr.bf16.mxu0 0
        %1164 = vmatpush2.bf16.msra.mxu0 0
        %1165 = vmatprep.subr.bf16.mxu0 0
        %1166 = vmatpush2.bf16.msra.mxu0 0
        %1167 = vmatprep.subr.bf16.mxu0 0
        %1168 = vmatpush2.bf16.msra.mxu0 0
        %1169 = vmatprep.mubr.bf16.mxu0 0
        %1170 = vmatmul.mubr.bf16.gmra.mxu0 %v1135
        %v1171 = vpop.f32.mrf.mxu0
        %v1172 = vadd.f32 0.0, %v1171
        %v1173 = vpop.f32.mrf.mxu0
        %v1174 = vpop.f32.mrf.mxu0
        %v1175 = vadd.f32 0.0, %v1174
        %v1176 = vpop.f32.mrf.mxu0
        %1177 = vdwg.mxu0
        %v1178 = vadd.f32 %v1047, %v1172
        %v1179 = vadd.f32 %v1050, %v1175
        %vm1180 = vcmp.ge.s32.totalorder %v797, 24
        %vm1181 = vcmp.lt.s32.totalorder %v797, 32
        %vm1182 = vmand %vm1180, %vm1181
        %v1183 = vsel %vm1182, 1.0, 0.0
        %v1184 = vmul.f32 %v658, %v1183
        %v1185 = vmul.f32 %v661, %v1183
        %v1186 = vpack.c.bf16 %v1185, %v1184
        %v1188 = vsel %vm619, %v1186, 0
        %1190 = vmatprep.subr.bf16.mxu0 0
        %1191 = vmatpush1.bf16.xpose.msra.mxu0 0
        %1192 = vmatprep.subr.bf16.mxu0 0
        %1193 = vmatpush1.bf16.xpose.msra.mxu0 0
        %1194 = vmatprep.subr.bf16.mxu0 0
        %1195 = vmatpush1.bf16.xpose.msra.mxu0 0
        %1196 = vmatprep.subr.bf16.mxu0 0
        %1197 = vmatpush1.bf16.xpose.msra.mxu0 0
        %1198 = vmatprep.subr.bf16.mxu0 0
        %1199 = vmatpush1.bf16.xpose.msra.mxu0 0
        %1200 = vmatprep.subr.bf16.mxu0 0
        %1201 = vmatpush1.bf16.xpose.msra.mxu0 0
        %1202 = vmatprep.subr.bf16.mxu0 0
        %1203 = vmatpush1.bf16.xpose.msra.mxu0 0
        %1204 = vmatprep.subr.bf16.mxu0 0
        %1205 = vmatpush1.bf16.xpose.msra.mxu0 %v810
        %1206 = vmatprep.subr.bf16.mxu0 0
        %1207 = vmatpush2.bf16.xpose.msra.mxu0 0
        %1208 = vmatprep.subr.bf16.mxu0 0
        %1209 = vmatpush2.bf16.xpose.msra.mxu0 0
        %1210 = vmatprep.subr.bf16.mxu0 0
        %1211 = vmatpush2.bf16.xpose.msra.mxu0 0
        %1212 = vmatprep.subr.bf16.mxu0 0
        %1213 = vmatpush2.bf16.xpose.msra.mxu0 0
        %1214 = vmatprep.subr.bf16.mxu0 0
        %1215 = vmatpush2.bf16.xpose.msra.mxu0 0
        %1216 = vmatprep.subr.bf16.mxu0 0
        %1217 = vmatpush2.bf16.xpose.msra.mxu0 0
        %1218 = vmatprep.subr.bf16.mxu0 0
        %1219 = vmatpush2.bf16.xpose.msra.mxu0 0
        %1220 = vmatprep.subr.bf16.mxu0 0
        %1221 = vmatpush2.bf16.xpose.msra.mxu0 0
        %1222 = vmatprep.mubr.bf16.mxu0 0
        %1223 = vmatmul.mubr.bf16.gmra.mxu0 %v1188
        %v1224 = vpop.f32.mrf.mxu0
        %v1225 = vadd.f32 0.0, %v1224
        %v1226 = vpop.f32.mrf.mxu0
        %v1227 = vpop.f32.mrf.mxu0
        %v1228 = vadd.f32 0.0, %v1227
        %v1229 = vpop.f32.mrf.mxu0
        %1230 = vdwg.mxu0
        %v1231 = vmul.f32 %v1225, 0.35355338
        %v1232 = vmul.f32 %v1228, 0.35355338
        %v1233 = vadd.f32 %v1231, %v593
        %v1234 = vadd.f32 %v1232, %v594
        %v1235 = vsel %vm857, %v1233, -inf
        %1236 = vmax.xlane.f32.xlu0 %v1235
        %v1237 = vpop.xlane.xlu0 %1236
        %v1238 = vsel %vm857, %v1234, -inf
        %1239 = vmax.xlane.f32.xlu0 %v1238
        %v1240 = vpop.xlane.xlu0 %1239
        %v1241 = vsub.f32 %v1233, %v1237
        %v1242 = vsub.f32 %v1234, %v1240
        %v1243 = vmul.f32 %v1241, 1.442695
        %v1244 = vpow.pop %v1243
        %v1245 = vmul.f32 %v1242, 1.442695
        %v1246 = vpow.pop %v1245
        %v1247 = vsel %vm857, %v1244, 0.0
        %1248 = vadd.xlane.f32.xlu0 %v1247
        %v1249 = vpop.xlane.xlu0 %1248
        %v1250 = vsel %vm857, %v1246, 0.0
        %1251 = vadd.xlane.f32.xlu0 %v1250
        %v1252 = vpop.xlane.xlu0 %1251
        %v1253 = vrcp.pop %v1249
        %v1254 = vmul.f32 %v1244, %v1253
        %v1255 = vrcp.pop %v1252
        %v1256 = vmul.f32 %v1246, %v1255
        %v1257 = vpack.c.bf16 %v1256, %v1254
        %v1258 = vmul.f32 %v790, %v1183
        %v1259 = vmul.f32 %v793, %v1183
        %v1260 = vpack.c.bf16 %v1259, %v1258
        %v1262 = vsel %vm857, %v1257, 0
        %1264 = vmatprep.subr.bf16.mxu0 0
        %1265 = vmatpush1.bf16.msra.mxu0 0
        %1266 = vmatprep.subr.bf16.mxu0 0
        %1267 = vmatpush1.bf16.msra.mxu0 0
        %1268 = vmatprep.subr.bf16.mxu0 0
        %1269 = vmatpush1.bf16.msra.mxu0 0
        %1270 = vmatprep.subr.bf16.mxu0 0
        %1271 = vmatpush1.bf16.msra.mxu0 0
        %1272 = vmatprep.subr.bf16.mxu0 0
        %1273 = vmatpush1.bf16.msra.mxu0 0
        %1274 = vmatprep.subr.bf16.mxu0 0
        %1275 = vmatpush1.bf16.msra.mxu0 0
        %1276 = vmatprep.subr.bf16.mxu0 0
        %1277 = vmatpush1.bf16.msra.mxu0 0
        %1278 = vmatprep.subr.bf16.mxu0 0
        %1279 = vmatpush1.bf16.msra.mxu0 %v1260
        %1280 = vmatprep.subr.bf16.mxu0 0
        %1281 = vmatpush2.bf16.msra.mxu0 0
        %1282 = vmatprep.subr.bf16.mxu0 0
        %1283 = vmatpush2.bf16.msra.mxu0 0
        %1284 = vmatprep.subr.bf16.mxu0 0
        %1285 = vmatpush2.bf16.msra.mxu0 0
        %1286 = vmatprep.subr.bf16.mxu0 0
        %1287 = vmatpush2.bf16.msra.mxu0 0
        %1288 = vmatprep.subr.bf16.mxu0 0
        %1289 = vmatpush2.bf16.msra.mxu0 0
        %1290 = vmatprep.subr.bf16.mxu0 0
        %1291 = vmatpush2.bf16.msra.mxu0 0
        %1292 = vmatprep.subr.bf16.mxu0 0
        %1293 = vmatpush2.bf16.msra.mxu0 0
        %1294 = vmatprep.subr.bf16.mxu0 0
        %1295 = vmatpush2.bf16.msra.mxu0 0
        %1296 = vmatprep.mubr.bf16.mxu0 0
        %1297 = vmatmul.mubr.bf16.gmra.mxu0 %v1262
        %v1298 = vpop.f32.mrf.mxu0
        %v1299 = vadd.f32 0.0, %v1298
        %v1300 = vpop.f32.mrf.mxu0
        %v1301 = vpop.f32.mrf.mxu0
        %v1302 = vadd.f32 0.0, %v1301
        %v1303 = vpop.f32.mrf.mxu0
        %1304 = vdwg.mxu0
        %v1305 = vadd.f32 %v1178, %v1299
        %v1306 = vadd.f32 %v1179, %v1302
        %s1307 = scalar_lea.vmem %s455, 48 [#allocation3]
        %v1308 = vld [vmem:[%s1307] sm:$0xf]
        %v1309 = vld [vmem:[%s1307 + $0x4] sm:$0xf]
        %v1310 = vld [vmem:[%s1307 + $0x8] sm:$0xf]
        %v1311 = vld [vmem:[%s1307 + $0xc] sm:$0xf]
        %v1312 = vpack.c.bf16 %v1306, %v1305
        %s1313 = scalar_lea.vmem %s517, 3
        %v1314 = vld [vmem:[%s1313] sm:$0x1]
        %v1316 = vlaneseq
        %v1317 = vshrl.u32 %v1316, 7
        %v1318 = vsub.s32 0, %v1317
        %v1319 = vrot.slane %v1314, %v1318
        %v1325 = vunpack.c.l.b16 %v1308
        %v1326 = vunpack.c.l.b16 %v1309
        %v1327 = vunpack.c.l.b16 %v1310
        %v1328 = vunpack.c.l.b16 %v1311
        %v1329 = vpack.c.b16 %v1326, %v1325
        %v1330 = vpack.c.b16 %v1328, %v1327
        %v1334 = vsel %vm619, %v1312, 0
        %1336 = vmatprep.subr.bf16.mxu0 0
        %1337 = vmatpush1.bf16.msra.mxu0 0
        %1338 = vmatprep.subr.bf16.mxu0 0
        %1339 = vmatpush1.bf16.msra.mxu0 0
        %1340 = vmatprep.subr.bf16.mxu0 0
        %1341 = vmatpush1.bf16.msra.mxu0 0
        %1342 = vmatprep.subr.bf16.mxu0 0
        %1343 = vmatpush1.bf16.msra.mxu0 0
        %1344 = vmatprep.subr.bf16.mxu0 0
        %1345 = vmatpush1.bf16.msra.mxu0 0
        %1346 = vmatprep.subr.bf16.mxu0 0
        %1347 = vmatpush1.bf16.msra.mxu0 0
        %1348 = vmatprep.subr.bf16.mxu0 0
        %1349 = vmatpush1.bf16.msra.mxu0 %v1330
        %1350 = vmatprep.subr.bf16.mxu0 0
        %1351 = vmatpush1.bf16.msra.mxu0 %v1329
        %1352 = vmatprep.subr.bf16.mxu0 0
        %1353 = vmatpush2.bf16.msra.mxu0 0
        %1354 = vmatprep.subr.bf16.mxu0 0
        %1355 = vmatpush2.bf16.msra.mxu0 0
        %1356 = vmatprep.subr.bf16.mxu0 0
        %1357 = vmatpush2.bf16.msra.mxu0 0
        %1358 = vmatprep.subr.bf16.mxu0 0
        %1359 = vmatpush2.bf16.msra.mxu0 0
        %1360 = vmatprep.subr.bf16.mxu0 0
        %1361 = vmatpush2.bf16.msra.mxu0 0
        %1362 = vmatprep.subr.bf16.mxu0 0
        %1363 = vmatpush2.bf16.msra.mxu0 0
        %1364 = vmatprep.subr.bf16.mxu0 0
        %1365 = vmatpush2.bf16.msra.mxu0 0
        %1366 = vmatprep.subr.bf16.mxu0 0
        %1367 = vmatpush2.bf16.msra.mxu0 0
        %1368 = vmatprep.mubr.bf16.mxu0 0
        %1369 = vmatmul.mubr.bf16.gmra.mxu0 %v1334
        %v1370 = vpop.f32.mrf.mxu0
        %v1371 = vadd.f32 %v1319, %v1370
        %v1372 = vpop.f32.mrf.mxu0
        %v1373 = vpop.f32.mrf.mxu0
        %v1374 = vadd.f32 %v1319, %v1373
        %v1375 = vpop.f32.mrf.mxu0
        %1376 = vdwg.mxu0
        %v1377 = vadd.f32 %v591, %v1371
        %v1378 = vadd.f32 %v592, %v1374
        %v1379 = vld [vmem:[%s534] sm:$0x1]
        %s1380 = scalar_lea.vmem %s534, 1
        %v1381 = vld [vmem:[%s1380] sm:$0x1]
        %v1382 = vsel %vm619, %v1377, 0.0
        %1383 = vadd.xlane.f32.xlu0 %v1382
        %v1384 = vpop.xlane.xlu0 %1383
        %v1385 = vsel %vm619, %v1378, 0.0
        %1386 = vadd.xlane.f32.xlu0 %v1385
        %v1387 = vpop.xlane.xlu0 %1386
        %v1388 = vrcp.pop 32.0
        %v1389 = vmul.f32 %v1384, %v1388
        %v1390 = vmul.f32 %v1387, %v1388
        %v1391 = vsub.f32 %v1377, %v1389
        %v1392 = vsub.f32 %v1378, %v1390
        %v1393 = vmul.f32 %v1391, %v1391
        %v1394 = vmul.f32 %v1392, %v1392
        %v1395 = vsel %vm619, %v1393, 0.0
        %1396 = vadd.xlane.f32.xlu0 %v1395
        %v1397 = vpop.xlane.xlu0 %1396
        %v1398 = vsel %vm619, %v1394, 0.0
        %1399 = vadd.xlane.f32.xlu0 %v1398
        %v1400 = vpop.xlane.xlu0 %1399
        %v1401 = vmul.f32 %v1397, %v1388
        %v1402 = vmul.f32 %v1400, %v1388
        %v1403 = vadd.f32 %v1401, 1e-12
        %v1404 = vadd.f32 %v1402, 1e-12
        %v1405 = vrsqrt.pop %v1403
        %v1406 = vrsqrt.pop %v1404
        %v1407 = vmul.f32 %v1391, %v1405
        %v1408 = vmul.f32 %v1392, %v1406
        %v1410 = vlaneseq
        %v1411 = vshrl.u32 %v1410, 7
        %v1412 = vsub.s32 0, %v1411
        %v1413 = vrot.slane %v1379, %v1412
        %v1415 = vmul.f32 %v1413, %v1407
        %v1416 = vmul.f32 %v1413, %v1408
        %v1418 = vlaneseq
        %v1419 = vshrl.u32 %v1418, 7
        %v1420 = vsub.s32 0, %v1419
        %v1421 = vrot.slane %v1381, %v1420
        %v1423 = vadd.f32 %v1415, %v1421
        %v1424 = vadd.f32 %v1416, %v1421
        %v1425 = vld [vmem:[%s522] sm:$0xf]
        %v1426 = vld [vmem:[%s522 + $0x4] sm:$0xf]
        %v1427 = vld [vmem:[%s522 + $0x8] sm:$0xf]
        %v1428 = vld [vmem:[%s522 + $0xc] sm:$0xf]
        %v1429 = vpack.c.bf16 %v1424, %v1423
        %v1430 = vld [vmem:[%s525] sm:$0x1]
        %v1432 = vlaneseq
        %v1433 = vshrl.u32 %v1432, 7
        %v1434 = vsub.s32 0, %v1433
        %v1435 = vrot.slane %v1430, %v1434
        %v1441 = vunpack.c.l.b16 %v1425
        %v1442 = vunpack.c.l.b16 %v1426
        %v1443 = vunpack.c.l.b16 %v1427
        %v1444 = vunpack.c.l.b16 %v1428
        %v1445 = vpack.c.b16 %v1442, %v1441
        %v1446 = vpack.c.b16 %v1444, %v1443
        %v1450 = vsel %vm619, %v1429, 0
        %1452 = vmatprep.subr.bf16.mxu0 0
        %1453 = vmatpush1.bf16.msra.mxu0 0
        %1454 = vmatprep.subr.bf16.mxu0 0
        %1455 = vmatpush1.bf16.msra.mxu0 0
        %1456 = vmatprep.subr.bf16.mxu0 0
        %1457 = vmatpush1.bf16.msra.mxu0 0
        %1458 = vmatprep.subr.bf16.mxu0 0
        %1459 = vmatpush1.bf16.msra.mxu0 0
        %1460 = vmatprep.subr.bf16.mxu0 0
        %1461 = vmatpush1.bf16.msra.mxu0 0
        %1462 = vmatprep.subr.bf16.mxu0 0
        %1463 = vmatpush1.bf16.msra.mxu0 0
        %1464 = vmatprep.subr.bf16.mxu0 0
        %1465 = vmatpush1.bf16.msra.mxu0 %v1446
        %1466 = vmatprep.subr.bf16.mxu0 0
        %1467 = vmatpush1.bf16.msra.mxu0 %v1445
        %1468 = vmatprep.subr.bf16.mxu0 0
        %1469 = vmatpush2.bf16.msra.mxu0 0
        %1470 = vmatprep.subr.bf16.mxu0 0
        %1471 = vmatpush2.bf16.msra.mxu0 0
        %1472 = vmatprep.subr.bf16.mxu0 0
        %1473 = vmatpush2.bf16.msra.mxu0 0
        %1474 = vmatprep.subr.bf16.mxu0 0
        %1475 = vmatpush2.bf16.msra.mxu0 0
        %1476 = vmatprep.subr.bf16.mxu0 0
        %1477 = vmatpush2.bf16.msra.mxu0 0
        %1478 = vmatprep.subr.bf16.mxu0 0
        %1479 = vmatpush2.bf16.msra.mxu0 0
        %1480 = vmatprep.subr.bf16.mxu0 0
        %1481 = vmatpush2.bf16.msra.mxu0 0
        %1482 = vmatprep.subr.bf16.mxu0 0
        %1483 = vmatpush2.bf16.msra.mxu0 0
        %1484 = vmatprep.mubr.bf16.mxu0 0
        %1485 = vmatmul.mubr.bf16.gmra.mxu0 %v1450
        %v1486 = vpop.f32.mrf.mxu0
        %v1487 = vadd.f32 %v1435, %v1486
        %v1488 = vpop.f32.mrf.mxu0
        %v1489 = vpop.f32.mrf.mxu0
        %v1490 = vadd.f32 %v1435, %v1489
        %v1491 = vpop.f32.mrf.mxu0
        %1492 = vdwg.mxu0
        %v1493 = vmul.f32 %v1487, 0.5
        %v1494 = vmul.f32 %v1490, 0.5
        %v1495 = vmul.f32 %v1487, 0.70710677
        %v1496 = vmul.f32 %v1490, 0.70710677
        %vm1497 = vcmp.ge.f32.partialorder %v1495, 0.0
        %vm1498 = vcmp.ge.f32.partialorder %v1496, 0.0
        %v1499 = vsel %vm1497, 1.0, -1.0
        %v1500 = vsel %vm1498, 1.0, -1.0
        %v1501 = vand.u32 2147483647, %v1495
        %v1502 = vand.u32 2147483647, %v1496
        %v1503 = vmul.f32 %v1501, 0.3275911
        %v1504 = vmul.f32 %v1502, 0.3275911
        %v1505 = vadd.f32 %v1503, 1.0
        %v1506 = vadd.f32 %v1504, 1.0
        %v1507 = vrcp.pop %v1505
        %v1508 = vmul.f32 1.0, %v1507
        %v1509 = vrcp.pop %v1506
        %v1510 = vmul.f32 1.0, %v1509
        %v1511 = vmul.f32 %v1508, 1.0614054
        %v1512 = vmul.f32 %v1510, 1.0614054
        %v1513 = vadd.f32 %v1511, -1.4531521
        %v1514 = vadd.f32 %v1512, -1.4531521
        %v1515 = vmul.f32 %v1513, %v1508
        %v1516 = vmul.f32 %v1514, %v1510
        %v1517 = vadd.f32 %v1515, 1.4214138
        %v1518 = vadd.f32 %v1516, 1.4214138
        %v1519 = vmul.f32 %v1517, %v1508
        %v1520 = vmul.f32 %v1518, %v1510
        %v1521 = vadd.f32 %v1519, -0.28449672
        %v1522 = vadd.f32 %v1520, -0.28449672
        %v1523 = vmul.f32 %v1521, %v1508
        %v1524 = vmul.f32 %v1522, %v1510
        %v1525 = vadd.f32 %v1523, 0.2548296
        %v1526 = vadd.f32 %v1524, 0.2548296
        %v1527 = vmul.f32 %v1525, %v1508
        %v1528 = vmul.f32 %v1526, %v1510
        %v1529 = vsub.f32 0.0, %v1501
        %v1530 = vsub.f32 0.0, %v1502
        %v1531 = vmul.f32 %v1529, %v1501
        %v1532 = vmul.f32 %v1530, %v1502
        %v1533 = vmul.f32 %v1531, 1.442695
        %v1534 = vpow.pop %v1533
        %v1535 = vmul.f32 %v1532, 1.442695
        %v1536 = vpow.pop %v1535
        %v1537 = vmul.f32 %v1527, %v1534
        %v1538 = vmul.f32 %v1528, %v1536
        %v1539 = vsub.f32 1.0, %v1537
        %v1540 = vsub.f32 1.0, %v1538
        %v1541 = vmul.f32 %v1499, %v1539
        %v1542 = vmul.f32 %v1500, %v1540
        %v1543 = vadd.f32 %v1541, 1.0
        %v1544 = vadd.f32 %v1542, 1.0
        %v1545 = vmul.f32 %v1493, %v1543
        %v1546 = vmul.f32 %v1494, %v1544
        %v1547 = vld [vmem:[%s530] sm:$0xf]
        %v1548 = vld [vmem:[%s530 + $0x4] sm:$0xf]
        %v1549 = vld [vmem:[%s530 + $0x8] sm:$0xf]
        %v1550 = vld [vmem:[%s530 + $0xc] sm:$0xf]
        %v1551 = vld [vmem:[%s530 + $0x10] sm:$0xf]
        %v1552 = vld [vmem:[%s530 + $0x14] sm:$0xf]
        %v1553 = vld [vmem:[%s530 + $0x18] sm:$0xf]
        %v1554 = vld [vmem:[%s530 + $0x1c] sm:$0xf]
        %v1555 = vpack.c.bf16 %v1546, %v1545
        %s1556 = scalar_lea.vmem %s534, 4
        %v1557 = vld [vmem:[%s1556] sm:$0x1]
        %v1559 = vlaneseq
        %v1560 = vshrl.u32 %v1559, 7
        %v1561 = vsub.s32 0, %v1560
        %v1562 = vrot.slane %v1557, %v1561
        %v1572 = vunpack.c.l.b16 %v1547
        %v1573 = vunpack.c.l.b16 %v1548
        %v1574 = vunpack.c.l.b16 %v1549
        %v1575 = vunpack.c.l.b16 %v1550
        %v1576 = vunpack.c.l.b16 %v1551
        %v1577 = vunpack.c.l.b16 %v1552
        %v1578 = vunpack.c.l.b16 %v1553
        %v1579 = vunpack.c.l.b16 %v1554
        %v1580 = vpack.c.b16 %v1573, %v1572
        %v1581 = vpack.c.b16 %v1575, %v1574
        %v1582 = vpack.c.b16 %v1577, %v1576
        %v1583 = vpack.c.b16 %v1579, %v1578
        %vm1588 = vcmask 523264
        %v1590 = vsel %vm1588, %v1555, 0
        %1592 = vmatprep.subr.bf16.mxu0 0
        %1593 = vmatpush1.bf16.msra.mxu0 0
        %1594 = vmatprep.subr.bf16.mxu0 0
        %1595 = vmatpush1.bf16.msra.mxu0 0
        %1596 = vmatprep.subr.bf16.mxu0 0
        %1597 = vmatpush1.bf16.msra.mxu0 0
        %1598 = vmatprep.subr.bf16.mxu0 0
        %1599 = vmatpush1.bf16.msra.mxu0 0
        %1600 = vmatprep.subr.bf16.mxu0 0
        %1601 = vmatpush1.bf16.msra.mxu0 %v1583
        %1602 = vmatprep.subr.bf16.mxu0 0
        %1603 = vmatpush1.bf16.msra.mxu0 %v1582
        %1604 = vmatprep.subr.bf16.mxu0 0
        %1605 = vmatpush1.bf16.msra.mxu0 %v1581
        %1606 = vmatprep.subr.bf16.mxu0 0
        %1607 = vmatpush1.bf16.msra.mxu0 %v1580
        %1608 = vmatprep.subr.bf16.mxu0 0
        %1609 = vmatpush2.bf16.msra.mxu0 0
        %1610 = vmatprep.subr.bf16.mxu0 0
        %1611 = vmatpush2.bf16.msra.mxu0 0
        %1612 = vmatprep.subr.bf16.mxu0 0
        %1613 = vmatpush2.bf16.msra.mxu0 0
        %1614 = vmatprep.subr.bf16.mxu0 0
        %1615 = vmatpush2.bf16.msra.mxu0 0
        %1616 = vmatprep.subr.bf16.mxu0 0
        %1617 = vmatpush2.bf16.msra.mxu0 0
        %1618 = vmatprep.subr.bf16.mxu0 0
        %1619 = vmatpush2.bf16.msra.mxu0 0
        %1620 = vmatprep.subr.bf16.mxu0 0
        %1621 = vmatpush2.bf16.msra.mxu0 0
        %1622 = vmatprep.subr.bf16.mxu0 0
        %1623 = vmatpush2.bf16.msra.mxu0 0
        %1624 = vmatprep.mubr.bf16.mxu0 0
        %1625 = vmatmul.mubr.bf16.gmra.mxu0 %v1590
        %v1626 = vpop.f32.mrf.mxu0
        %v1627 = vadd.f32 %v1562, %v1626
        %v1628 = vpop.f32.mrf.mxu0
        %v1629 = vpop.f32.mrf.mxu0
        %v1630 = vadd.f32 %v1562, %v1629
        %v1631 = vpop.f32.mrf.mxu0
        %1632 = vdwg.mxu0
        %v1633 = vadd.f32 %v1423, %v1627
        %v1634 = vadd.f32 %v1424, %v1630
        %s1635 = scalar_lea.vmem %s534, 2
        %v1636 = vld [vmem:[%s1635] sm:$0x1]
        %s1637 = scalar_lea.vmem %s534, 3
        %v1638 = vld [vmem:[%s1637] sm:$0x1]
        %v1639 = vsel %vm619, %v1633, 0.0
        %1640 = vadd.xlane.f32.xlu0 %v1639
        %v1641 = vpop.xlane.xlu0 %1640
        %v1642 = vsel %vm619, %v1634, 0.0
        %1643 = vadd.xlane.f32.xlu0 %v1642
        %v1644 = vpop.xlane.xlu0 %1643
        %v1645 = vmul.f32 %v1641, %v1388
        %v1646 = vmul.f32 %v1644, %v1388
        %v1647 = vsub.f32 %v1633, %v1645
        %v1648 = vsub.f32 %v1634, %v1646
        %v1649 = vmul.f32 %v1647, %v1647
        %v1650 = vmul.f32 %v1648, %v1648
        %v1651 = vsel %vm619, %v1649, 0.0
        %1652 = vadd.xlane.f32.xlu0 %v1651
        %v1653 = vpop.xlane.xlu0 %1652
        %v1654 = vsel %vm619, %v1650, 0.0
        %1655 = vadd.xlane.f32.xlu0 %v1654
        %v1656 = vpop.xlane.xlu0 %1655
        %v1657 = vmul.f32 %v1653, %v1388
        %v1658 = vmul.f32 %v1656, %v1388
        %v1659 = vadd.f32 %v1657, 1e-12
        %v1660 = vadd.f32 %v1658, 1e-12
        %v1661 = vrsqrt.pop %v1659
        %v1662 = vrsqrt.pop %v1660
        %v1663 = vmul.f32 %v1647, %v1661
        %v1664 = vmul.f32 %v1648, %v1662
        %v1666 = vlaneseq
        %v1667 = vshrl.u32 %v1666, 7
        %v1668 = vsub.s32 0, %v1667
        %v1669 = vrot.slane %v1636, %v1668
        %v1671 = vmul.f32 %v1669, %v1663
        %v1672 = vmul.f32 %v1669, %v1664
        %v1674 = vlaneseq
        %v1675 = vshrl.u32 %v1674, 7
        %v1676 = vsub.s32 0, %v1675
        %v1677 = vrot.slane %v1638, %v1676
        %v1679 = vadd.f32 %v1671, %v1677
        %v1680 = vadd.f32 %v1672, %v1677
        %1681 = vst.msk [vmem:[#allocation2] sm:$0xff] %vm619, %v1679
        %1682 = vst.msk [vmem:[#allocation2 + $0x8] sm:$0xff] %vm619, %v1680
        %p1683 = scmp.eq.s32.totalorder %s28, 1
        // Predicated region
        $region81: #{tpu_custom_call.1} parent=71 // pred_check
          %p1684 = pneg %p1683
        $region82: #{tpu_custom_call.1} parent=71 // pred_check_branch
          %1686 = sbr.rel (%p1684) target = $region84
        $region83: #{tpu_custom_call.1} parent=71 // pred_region
          %v1688 = vrot.slane %v1680, 7
          %vm1690 = vcmask 1040384
          %v1691 = vsel %vm1690, %v1679, %v1688
          %v1692 = vld [vmem:[%s9] sm:$0xf]
          %v1693 = vld [vmem:[%s9 + $0x4] sm:$0xf]
          %v1694 = vld [vmem:[%s9 + $0x8] sm:$0xf]
          %v1695 = vld [vmem:[%s9 + $0xc] sm:$0xf]
          %v1696 = vpack.c.bf16 %v1691, %v1691
          %v1697 = vld [vmem:[%s10] sm:$0x1]
          %v1699 = vlaneseq
          %v1700 = vshrl.u32 %v1699, 7
          %v1701 = vsub.s32 0, %v1700
          %v1702 = vrot.slane %v1697, %v1701
          %v1708 = vunpack.c.l.b16 %v1692
          %v1709 = vunpack.c.l.b16 %v1693
          %v1710 = vunpack.c.l.b16 %v1694
          %v1711 = vunpack.c.l.b16 %v1695
          %v1712 = vpack.c.b16 %v1709, %v1708
          %v1713 = vpack.c.b16 %v1711, %v1710
          %v1717 = vsel %vm619, %v1696, 0
          %1719 = vmatprep.subr.bf16.mxu0 0
          %1720 = vmatpush1.bf16.msra.mxu0 0
          %1721 = vmatprep.subr.bf16.mxu0 0
          %1722 = vmatpush1.bf16.msra.mxu0 0
          %1723 = vmatprep.subr.bf16.mxu0 0
          %1724 = vmatpush1.bf16.msra.mxu0 0
          %1725 = vmatprep.subr.bf16.mxu0 0
          %1726 = vmatpush1.bf16.msra.mxu0 0
          %1727 = vmatprep.subr.bf16.mxu0 0
          %1728 = vmatpush1.bf16.msra.mxu0 0
          %1729 = vmatprep.subr.bf16.mxu0 0
          %1730 = vmatpush1.bf16.msra.mxu0 0
          %1731 = vmatprep.subr.bf16.mxu0 0
          %1732 = vmatpush1.bf16.msra.mxu0 %v1713
          %1733 = vmatprep.subr.bf16.mxu0 0
          %1734 = vmatpush1.bf16.msra.mxu0 %v1712
          %1735 = vmatprep.subr.bf16.mxu0 0
          %1736 = vmatpush2.bf16.msra.mxu0 0
          %1737 = vmatprep.subr.bf16.mxu0 0
          %1738 = vmatpush2.bf16.msra.mxu0 0
          %1739 = vmatprep.subr.bf16.mxu0 0
          %1740 = vmatpush2.bf16.msra.mxu0 0
          %1741 = vmatprep.subr.bf16.mxu0 0
          %1742 = vmatpush2.bf16.msra.mxu0 0
          %1743 = vmatprep.subr.bf16.mxu0 0
          %1744 = vmatpush2.bf16.msra.mxu0 0
          %1745 = vmatprep.subr.bf16.mxu0 0
          %1746 = vmatpush2.bf16.msra.mxu0 0
          %1747 = vmatprep.subr.bf16.mxu0 0
          %1748 = vmatpush2.bf16.msra.mxu0 0
          %1749 = vmatprep.subr.bf16.mxu0 0
          %1750 = vmatpush2.bf16.msra.mxu0 0
          %1751 = vmatprep.mubr.bf16.mxu0 0
          %1752 = vmatmul.mubr.bf16.gmra.mxu0 %v1717
          %v1753 = vpop.f32.mrf.mxu0
          %v1754 = vadd.f32 %v1702, %v1753
          %v1755 = vpop.f32.mrf.mxu0
          %v1756 = vpop.f32.mrf.mxu0
          %v1757 = vpop.f32.mrf.mxu0
          %1758 = vdwg.mxu0
          %v1759 = vtanh.pop %v1754
          %v1760 = vld [vmem:[%s11] sm:$0xf]
          %v1761 = vld [vmem:[%s11 + $0x4] sm:$0xf]
          %v1762 = vld [vmem:[%s11 + $0x8] sm:$0xf]
          %v1763 = vld [vmem:[%s11 + $0xc] sm:$0xf]
          %v1764 = vpack.c.bf16 %v1759, %v1759
          %v1765 = vld [vmem:[%s12] sm:$0x1]
          %v1767 = vlaneseq
          %v1768 = vshrl.u32 %v1767, 7
          %v1769 = vsub.s32 0, %v1768
          %v1770 = vrot.slane %v1765, %v1769
          %v1776 = vunpack.c.l.b16 %v1760
          %v1777 = vunpack.c.l.b16 %v1761
          %v1778 = vunpack.c.l.b16 %v1762
          %v1779 = vunpack.c.l.b16 %v1763
          %v1780 = vpack.c.b16 %v1777, %v1776
          %v1781 = vpack.c.b16 %v1779, %v1778
          %v1785 = vsel %vm619, %v1764, 0
          %1787 = vmatprep.subr.bf16.mxu0 0
          %1788 = vmatpush1.bf16.msra.mxu0 0
          %1789 = vmatprep.subr.bf16.mxu0 0
          %1790 = vmatpush1.bf16.msra.mxu0 0
          %1791 = vmatprep.subr.bf16.mxu0 0
          %1792 = vmatpush1.bf16.msra.mxu0 0
          %1793 = vmatprep.subr.bf16.mxu0 0
          %1794 = vmatpush1.bf16.msra.mxu0 0
          %1795 = vmatprep.subr.bf16.mxu0 0
          %1796 = vmatpush1.bf16.msra.mxu0 0
          %1797 = vmatprep.subr.bf16.mxu0 0
          %1798 = vmatpush1.bf16.msra.mxu0 0
          %1799 = vmatprep.subr.bf16.mxu0 0
          %1800 = vmatpush1.bf16.msra.mxu0 %v1781
          %1801 = vmatprep.subr.bf16.mxu0 0
          %1802 = vmatpush1.bf16.msra.mxu0 %v1780
          %1803 = vmatprep.subr.bf16.mxu0 0
          %1804 = vmatpush2.bf16.msra.mxu0 0
          %1805 = vmatprep.subr.bf16.mxu0 0
          %1806 = vmatpush2.bf16.msra.mxu0 0
          %1807 = vmatprep.subr.bf16.mxu0 0
          %1808 = vmatpush2.bf16.msra.mxu0 0
          %1809 = vmatprep.subr.bf16.mxu0 0
          %1810 = vmatpush2.bf16.msra.mxu0 0
          %1811 = vmatprep.subr.bf16.mxu0 0
          %1812 = vmatpush2.bf16.msra.mxu0 0
          %1813 = vmatprep.subr.bf16.mxu0 0
          %1814 = vmatpush2.bf16.msra.mxu0 0
          %1815 = vmatprep.subr.bf16.mxu0 0
          %1816 = vmatpush2.bf16.msra.mxu0 0
          %1817 = vmatprep.subr.bf16.mxu0 0
          %1818 = vmatpush2.bf16.msra.mxu0 0
          %1819 = vmatprep.mubr.bf16.mxu0 0
          %1820 = vmatmul.mubr.bf16.gmra.mxu0 %v1785
          %v1821 = vpop.f32.mrf.mxu0
          %v1822 = vadd.f32 %v1770, %v1821
          %v1823 = vpop.f32.mrf.mxu0
          %v1824 = vpop.f32.mrf.mxu0
          %v1825 = vpop.f32.mrf.mxu0
          %1826 = vdwg.mxu0
          %vm1827 = vcmask 9216
          %1828 = vst.msk [vmem:[#allocation6] sm:$0x3] %vm1827, %v1822
        $region84: #{tpu_custom_call.1} parent=71 // pred_fallthru
          _
        // Predicated region
        $region85: #{tpu_custom_call.1} parent=71 // pred_check
          %p1829 = pneg %p344
        $region86: #{tpu_custom_call.1} parent=71 // pred_check_branch
          %1831 = sbr.rel (%p1829) target = $region88
        $region87: #{tpu_custom_call.1} parent=71 // pred_region
          %s1833 = ssub.s32 32, 32
          %1834 = vsyncadd [#allocation5], %s1833
          %s1836 = sshll.u32 [#allocation6], 4
          %s1837 = int_to_ptr.vmem [resolvable:$true] %s1836
          %1839 = dma.vmem_to_hbm [thread:$0]  %s1837, 32, %s13, [#allocation5]
        $region88: #{tpu_custom_call.1} parent=71 // pred_fallthru
          _
        // Predicated region
        $region89: #{tpu_custom_call.1} parent=71 // pred_check
          %p1840 = pneg %p344
        $region90: #{tpu_custom_call.1} parent=71 // pred_check_branch
          %1842 = sbr.rel (%p1840) target = $region92
        $region91: #{tpu_custom_call.1} parent=71 // pred_region
          %1843 = dma.done [#allocation5], 32
        $region92: #{tpu_custom_call.1} parent=71 // pred_fallthru
          _
      $region72: #{tpu_custom_call.1} parent=5 // pred_fallthru
        _
      %p1844 = scmp.le.s32.totalorder 2, %s23
      // Predicated region
      $region93: #{tpu_custom_call.1} parent=5 // pred_check
        %p1845 = pneg %p1844
      $region94: #{tpu_custom_call.1} parent=5 // pred_check_branch
        %1847 = sbr.rel (%p1845) target = $region96
      $region95: #{tpu_custom_call.1} parent=5 // pred_region
        %s1848 = ssub.s32 %s23, 2
      $region96: #{tpu_custom_call.1} parent=5 // pred_fallthru
        _
    $region6: #{tpu_custom_call.1} parent=1 // loop_footer
      %s27 = sadd.s32 1, %s23
    $region7: #{tpu_custom_call.1} parent=1 // loop_footer_branch
      %22 = sbr.rel target = $region3
    $region8: #{tpu_custom_call.1} parent=1 // loop_exit
      _
    %1849 = vsyncpa [#allocation4], 1
    %s1850 = scalar_lea.sflag [#allocation4], 1
    %1851 = vsyncpa %s1850, 1
    %1852 = vsyncpa [#allocation5], 1
    %s1853 = scalar_lea.sflag [#allocation5], 1
    %1854 = vsyncpa %s1853, 1

</llo_original>
